<compile_context>
chip_gen: v7x
topology: tpu7x:2x2x1
jax: 0.10.0
libtpu: 0.0.40
codegen_flags: <defaults>
</compile_context>

<pallas_src>
import functools

import jax
import jax.numpy as jnp
from jax.experimental import pallas as pl
from jax.experimental.pallas import tpu as pltpu


def _round_up(n, m):
    return ((n + m - 1) // m) * m


def _rnn_chunk_kernel(x_ref, h0_ref, wih_t_ref, whh_t_ref, b_ref, wdec_t_ref,
                      out_ref, hlast_ref, proj_ref, hcarry_ref, *, unroll):
    """One (batch-shard, time-chunk) grid step.

    x_ref:      (T_c, B_s, E_p)  input chunk
    h0_ref:     (B_s, H_p)       initial hidden state for this batch shard
    wih_t_ref:  (E_p, H_p)       w_ih^T (pre-transposed in wrapper)
    whh_t_ref:  (H_p, H_p)       w_hh^T
    b_ref:      (1, H_p)         combined bias (b_ih + b_hh), f32
    wdec_t_ref: (H_p, E_p)       decoder weight^T
    out_ref:    (T_c, B_s, E_p)  decoded outputs for this chunk
    hlast_ref:  (B_s, H_p)       final hidden state (written on last chunk)
    proj_ref:   (T_c, B_s, H_p)  f32 scratch: batched input projections
    hcarry_ref: (B_s, H_p)       f32 scratch: hidden carry across time chunks
    """
    c = pl.program_id(1)
    Tc, Bs, Ep = x_ref.shape
    Hp = hcarry_ref.shape[-1]

    # (0) Initialize the cross-chunk hidden carry on the first chunk of each
    #     batch shard.
    @pl.when(c == 0)
    def _():
        hcarry_ref[...] = h0_ref[...].astype(jnp.float32)

    # (1) Batched input projection (+ folded bias) for the whole chunk in one
    #     MXU call.  Reshapes only merge/split the leading dims over an
    #     (8,128)-aligned tile layout, so they are free relabelings.
    x2d = x_ref[...].reshape(Tc * Bs, Ep)
    proj = jnp.dot(x2d, wih_t_ref[...], preferred_element_type=jnp.float32)
    proj_ref[...] = (proj + b_ref[...]).reshape(Tc, Bs, Hp)

    # Loop-invariant operands hoisted out of the recurrence.
    whh_t = whh_t_ref[...]
    wdec_t = wdec_t_ref[...]
    mxu_dtype = whh_t.dtype
    h0 = hcarry_ref[...]

    # (2) Serial tanh recurrence.  Only the (B_s,H_p)x(H_p,H_p) matmul + tanh
    #     sit on the dependency chain; the per-step decoder matmul and output
    #     store are off the chain, so with partial unroll the scheduler
    #     interleaves them into the latency-bound recurrence.
    def step(t, h_prev):
        pre = proj_ref[t] + jnp.dot(h_prev.astype(mxu_dtype), whh_t,
                                    preferred_element_type=jnp.float32)
        h_new = jnp.tanh(pre)
        out_ref[t] = jnp.dot(h_new.astype(mxu_dtype), wdec_t,
                             preferred_element_type=jnp.float32
                             ).astype(out_ref.dtype)
        return h_new

    h_last = jax.lax.fori_loop(0, Tc, step, h0, unroll=unroll)
    hcarry_ref[...] = h_last

    # (3) Emit the final hidden state once, on the last time chunk.
    @pl.when(c == pl.num_programs(1) - 1)
    def _():
        hlast_ref[...] = h_last.astype(hlast_ref.dtype)


def simple_rnn_forward(inputs, hidden, params, *, time_chunk=64, batch_shards=1,
                       mxu_dtype=jnp.float32, unroll=8,
                       vmem_limit_bytes=48 * 1024 * 1024):
    """inputs: (T, B, E) f32; hidden: (1, B, H) f32.
    params: dict with w_ih (H,E), w_hh (H,H), b_ih (H,), b_hh (H,), w_dec (E,H).
    Returns (outputs (T,B,E), last_hidden (1,B,H))."""
    T, B, E = inputs.shape
    H = hidden.shape[-1]

    # --- Wrapper-side (XLA) layout prep ------------------------------------
    # Pad batch to sublane multiples (8 per shard) and emb/hidden to lane
    # multiples (128).  Zero padding is exact: padded hidden columns stay 0
    # through tanh because the padded weight/bias entries are 0, and padded
    # batch rows / emb columns are sliced away at the end.
    B_pad = _round_up(B, 8 * batch_shards)
    E_pad = _round_up(E, 128)
    H_pad = _round_up(H, 128)
    B_shard = B_pad // batch_shards

    # Time chunking: largest chunk <= time_chunk that divides T, so no ragged
    # last chunk ends up on the serial critical path.
    tc = max(1, min(time_chunk, T))
    while T % tc:
        tc -= 1
    num_chunks = T // tc

    x = jnp.pad(inputs, ((0, 0), (0, B_pad - B), (0, E_pad - E))).astype(mxu_dtype)
    h0 = jnp.pad(hidden.reshape(B, H), ((0, B_pad - B), (0, H_pad - H)))
    w_ih_t = jnp.pad(params["w_ih"].T,
                     ((0, E_pad - E), (0, H_pad - H))).astype(mxu_dtype)
    w_hh_t = jnp.pad(params["w_hh"].T,
                     ((0, H_pad - H), (0, H_pad - H))).astype(mxu_dtype)
    w_dec_t = jnp.pad(params["w_dec"].T,
                      ((0, H_pad - H), (0, E_pad - E))).astype(mxu_dtype)
    bias = jnp.pad((params["b_ih"] + params["b_hh"]).reshape(1, H),
                   ((0, 0), (0, H_pad - H))).astype(jnp.float32)

    kernel = functools.partial(_rnn_chunk_kernel, unroll=min(unroll, tc))

    grid_spec = pltpu.PrefetchScalarGridSpec(
        num_scalar_prefetch=0,
        # (parallel batch shards, serial time chunks)
        grid=(batch_shards, num_chunks),
        in_specs=[
            pl.BlockSpec((tc, B_shard, E_pad), lambda s, c: (c, s, 0)),  # x chunk
            pl.BlockSpec((B_shard, H_pad), lambda s, c: (s, 0)),         # h0
            pl.BlockSpec((E_pad, H_pad), lambda s, c: (0, 0)),           # w_ih^T
            pl.BlockSpec((H_pad, H_pad), lambda s, c: (0, 0)),           # w_hh^T
            pl.BlockSpec((1, H_pad), lambda s, c: (0, 0)),               # bias
            pl.BlockSpec((H_pad, E_pad), lambda s, c: (0, 0)),           # w_dec^T
        ],
        out_specs=[
            pl.BlockSpec((tc, B_shard, E_pad), lambda s, c: (c, s, 0)),  # outputs
            pl.BlockSpec((B_shard, H_pad), lambda s, c: (s, 0)),         # last h
        ],
        scratch_shapes=[
            pltpu.VMEM((tc, B_shard, H_pad), jnp.float32),  # chunk projections
            pltpu.VMEM((B_shard, H_pad), jnp.float32),      # hidden carry
        ],
    )

    out_pad, h_last_pad = pl.pallas_call(
        kernel,
        grid_spec=grid_spec,
        out_shape=(
            jax.ShapeDtypeStruct((T, B_pad, E_pad), jnp.float32),
            jax.ShapeDtypeStruct((B_pad, H_pad), jnp.float32),
        ),
        compiler_params=pltpu.CompilerParams(
            dimension_semantics=("parallel", "arbitrary"),
            vmem_limit_bytes=vmem_limit_bytes,
        ),
    )(x, h0, w_ih_t, w_hh_t, bias, w_dec_t)

    outputs = out_pad[:, :B, :E]
    last_hidden = h_last_pad[:B, :H].reshape(1, B, H)
    return outputs, last_hidden


def _ref_forward(inputs, hidden, params):
    """Pure-JAX reference matching torch nn.RNN(tanh) + Linear(bias=False)."""
    w_ih, w_hh = params["w_ih"], params["w_hh"]
    b = params["b_ih"] + params["b_hh"]
    w_dec = params["w_dec"]

    def step(h, x_t):
        h_new = jnp.tanh(x_t @ w_ih.T + h @ w_hh.T + b)
        return h_new, h_new

    h_last, hs = jax.lax.scan(step, hidden[0], inputs)
    outs = hs @ w_dec.T
    return outs, h_last[None]


if __name__ == "__main__":
    T, B, E, H = 8, 2, 16, 32  # seq_len, batch, emb_size, hidden_size

    key = jax.random.PRNGKey(0)
    k = jax.random.split(key, 7)
    bound = 1.0 / jnp.sqrt(H)  # PyTorch nn.RNN / Linear default init scale
    params = {
        "w_ih": jax.random.uniform(k[0], (H, E), jnp.float32, -bound, bound),
        "w_hh": jax.random.uniform(k[1], (H, H), jnp.float32, -bound, bound),
        "b_ih": jax.random.uniform(k[2], (H,), jnp.float32, -bound, bound),
        "b_hh": jax.random.uniform(k[3], (H,), jnp.float32, -bound, bound),
        "w_dec": jax.random.uniform(k[4], (E, H), jnp.float32, -bound, bound),
    }
    inputs = jax.random.normal(k[5], (T, B, E), jnp.float32)
    hidden = jax.random.normal(k[6], (1, B, H), jnp.float32)

    # time_chunk=4 -> 2 time chunks, exercising the streamed grid and the
    # cross-chunk hidden carry.  mxu_dtype stays f32 here so the tight
    # reference check passes; use jnp.bfloat16 at real model sizes.
    outputs, last_hidden = simple_rnn_forward(
        inputs, hidden, params, time_chunk=4, batch_shards=1,
        mxu_dtype=jnp.float32)
    jax.block_until_ready((outputs, last_hidden))

    ref_out, ref_h = _ref_forward(inputs, hidden, params)
    assert outputs.shape == (T, B, E) and last_hidden.shape == (1, B, H)
    assert jnp.allclose(outputs, ref_out, atol=1e-5, rtol=1e-5)
    assert jnp.allclose(last_hidden, ref_h, atol=1e-5, rtol=1e-5)

    print("KERNEL_OK")
</pallas_src>

<mosaic_0001>
module attributes {stable_mosaic.version = 11 : i64} {
  func.func @_rnn_chunk_kernel(%arg0: i32, %arg1: i32, %arg2: memref<4x8x128xf32, #tpu.memory_space<vmem>>, %arg3: memref<8x128xf32, #tpu.memory_space<vmem>>, %arg4: memref<128x128xf32, #tpu.memory_space<vmem>>, %arg5: memref<128x128xf32, #tpu.memory_space<vmem>>, %arg6: memref<1x128xf32, #tpu.memory_space<vmem>>, %arg7: memref<128x128xf32, #tpu.memory_space<vmem>>, %arg8: memref<4x8x128xf32, #tpu.memory_space<vmem>>, %arg9: memref<8x128xf32, #tpu.memory_space<vmem>>, %arg10: memref<4x8x128xf32, #tpu.memory_space<vmem>>, %arg11: memref<8x128xf32, #tpu.memory_space<vmem>>) attributes {dimension_semantics = [#tpu.dimension_semantics<parallel>, #tpu.dimension_semantics<arbitrary>], iteration_bounds = array<i64: 1, 2>, scalar_prefetch = 0 : i64, scratch_operands = 2 : i64, tpu.core_type = #tpu.core_type<tc>, window_params = [{transform_indices = @transform_0, window_bounds = array<i64: 4, 8, 128>}, {transform_indices = @transform_1, window_bounds = array<i64: 8, 128>}, {pipeline_mode = #tpu.pipeline_mode<synchronous>, transform_indices = @transform_2, window_bounds = array<i64: 128, 128>}, {pipeline_mode = #tpu.pipeline_mode<synchronous>, transform_indices = @transform_3, window_bounds = array<i64: 128, 128>}, {pipeline_mode = #tpu.pipeline_mode<synchronous>, transform_indices = @transform_4, window_bounds = array<i64: 1, 128>}, {pipeline_mode = #tpu.pipeline_mode<synchronous>, transform_indices = @transform_5, window_bounds = array<i64: 128, 128>}, {transform_indices = @transform_6, window_bounds = array<i64: 4, 8, 128>}, {transform_indices = @transform_7, window_bounds = array<i64: 8, 128>}]} {
    %c0_i32 = arith.constant 0 : i32
    %0 = arith.cmpi eq, %arg1, %c0_i32 : i32
    %1 = arith.extui %0 : i1 to i32
    %c0_i32_0 = arith.constant 0 : i32
    %2 = arith.cmpi ne, %1, %c0_i32_0 : i32
    scf.if %2 {
      %c0_45 = arith.constant 0 : index
      %c0_46 = arith.constant 0 : index
      %63 = vector.load %arg3[%c0_45, %c0_46] : memref<8x128xf32, #tpu.memory_space<vmem>>, vector<8x128xf32>
      %c0_47 = arith.constant 0 : index
      %c0_48 = arith.constant 0 : index
      %64 = vector.load %arg11[%c0_47, %c0_48] : memref<8x128xf32, #tpu.memory_space<vmem>>, vector<8x128xf32>
      tpu.vector_store %arg11[%c0_47, %c0_48], %63 {strides = array<i32>} : memref<8x128xf32, #tpu.memory_space<vmem>>, vector<8x128xf32>,
    } else {
    }
    %c0 = arith.constant 0 : index
    %c0_1 = arith.constant 0 : index
    %c0_2 = arith.constant 0 : index
    %3 = vector.load %arg2[%c0, %c0_1, %c0_2] : memref<4x8x128xf32, #tpu.memory_space<vmem>>, vector<4x8x128xf32>
    %4 = vector.shape_cast %3 : vector<4x8x128xf32> to vector<32x128xf32>
    %c0_3 = arith.constant 0 : index
    %c0_4 = arith.constant 0 : index
    %5 = vector.load %arg4[%c0_3, %c0_4] : memref<128x128xf32, #tpu.memory_space<vmem>>, vector<128x128xf32>
    %cst = arith.constant dense<0.000000e+00> : vector<32x128xf32>
    %6 = tpu.matmul %4, %5, %cst {dimension_numbers = #tpu.dot_dimension_numbers<[1], [0], [0], [1], [0, 0, 1, 1], [], []>} : vector<32x128xf32>, vector<128x128xf32>, vector<32x128xf32> -> vector<32x128xf32>
    %c0_5 = arith.constant 0 : index
    %c0_6 = arith.constant 0 : index
    %7 = vector.load %arg6[%c0_5, %c0_6] : memref<1x128xf32, #tpu.memory_space<vmem>>, vector<1x128xf32>
    %8 = vector.broadcast %7 : vector<1x128xf32> to vector<32x128xf32>
    %9 = arith.addf %6, %8 : vector<32x128xf32>
    %10 = vector.shape_cast %9 : vector<32x128xf32> to vector<4x8x128xf32>
    %c0_7 = arith.constant 0 : index
    %c0_8 = arith.constant 0 : index
    %c0_9 = arith.constant 0 : index
    %11 = vector.load %arg10[%c0_7, %c0_8, %c0_9] : memref<4x8x128xf32, #tpu.memory_space<vmem>>, vector<4x8x128xf32>
    tpu.vector_store %arg10[%c0_7, %c0_8, %c0_9], %10 {strides = array<i32>} : memref<4x8x128xf32, #tpu.memory_space<vmem>>, vector<4x8x128xf32>,
    %c0_10 = arith.constant 0 : index
    %c0_11 = arith.constant 0 : index
    %12 = vector.load %arg5[%c0_10, %c0_11] : memref<128x128xf32, #tpu.memory_space<vmem>>, vector<128x128xf32>
    %c0_12 = arith.constant 0 : index
    %c0_13 = arith.constant 0 : index
    %13 = vector.load %arg7[%c0_12, %c0_13] : memref<128x128xf32, #tpu.memory_space<vmem>>, vector<128x128xf32>
    %c0_14 = arith.constant 0 : index
    %c0_15 = arith.constant 0 : index
    %14 = vector.load %arg11[%c0_14, %c0_15] : memref<8x128xf32, #tpu.memory_space<vmem>>, vector<8x128xf32>
    %c0_i32_16 = arith.constant 0 : i32
    %15 = arith.index_cast %c0_i32_16 : i32 to index
    %c0_17 = arith.constant 0 : index
    %c0_18 = arith.constant 0 : index
    %16 = vector.load %arg10[%15, %c0_17, %c0_18] : memref<4x8x128xf32, #tpu.memory_space<vmem>>, vector<1x8x128xf32>
    %17 = vector.shape_cast %16 : vector<1x8x128xf32> to vector<8x128xf32>
    %cst_19 = arith.constant dense<0.000000e+00> : vector<8x128xf32>
    %18 = tpu.matmul %14, %12, %cst_19 {dimension_numbers = #tpu.dot_dimension_numbers<[1], [0], [0], [1], [0, 0, 1, 1], [], []>} : vector<8x128xf32>, vector<128x128xf32>, vector<8x128xf32> -> vector<8x128xf32>
    %19 = arith.addf %17, %18 : vector<8x128xf32>
    %20 = math.tanh %19 : vector<8x128xf32>
    %cst_20 = arith.constant dense<0.000000e+00> : vector<8x128xf32>
    %21 = tpu.matmul %20, %13, %cst_20 {dimension_numbers = #tpu.dot_dimension_numbers<[1], [0], [0], [1], [0, 0, 1, 1], [], []>} : vector<8x128xf32>, vector<128x128xf32>, vector<8x128xf32> -> vector<8x128xf32>
    %22 = arith.index_cast %c0_i32_16 : i32 to index
    %c0_21 = arith.constant 0 : index
    %c0_22 = arith.constant 0 : index
    %23 = vector.load %arg8[%22, %c0_21, %c0_22] : memref<4x8x128xf32, #tpu.memory_space<vmem>>, vector<1x8x128xf32>
    %24 = vector.shape_cast %23 : vector<1x8x128xf32> to vector<8x128xf32>
    %25 = vector.shape_cast %21 : vector<8x128xf32> to vector<1x8x128xf32>
    tpu.vector_store %arg8[%22, %c0_21, %c0_22], %25 {strides = array<i32>} : memref<4x8x128xf32, #tpu.memory_space<vmem>>, vector<1x8x128xf32>,
    %c1_i32 = arith.constant 1 : i32
    %26 = arith.index_cast %c1_i32 : i32 to index
    %c0_23 = arith.constant 0 : index
    %c0_24 = arith.constant 0 : index
    %27 = vector.load %arg10[%26, %c0_23, %c0_24] : memref<4x8x128xf32, #tpu.memory_space<vmem>>, vector<1x8x128xf32>
    %28 = vector.shape_cast %27 : vector<1x8x128xf32> to vector<8x128xf32>
    %cst_25 = arith.constant dense<0.000000e+00> : vector<8x128xf32>
    %29 = tpu.matmul %20, %12, %cst_25 {dimension_numbers = #tpu.dot_dimension_numbers<[1], [0], [0], [1], [0, 0, 1, 1], [], []>} : vector<8x128xf32>, vector<128x128xf32>, vector<8x128xf32> -> vector<8x128xf32>
    %30 = arith.addf %28, %29 : vector<8x128xf32>
    %31 = math.tanh %30 : vector<8x128xf32>
    %cst_26 = arith.constant dense<0.000000e+00> : vector<8x128xf32>
    %32 = tpu.matmul %31, %13, %cst_26 {dimension_numbers = #tpu.dot_dimension_numbers<[1], [0], [0], [1], [0, 0, 1, 1], [], []>} : vector<8x128xf32>, vector<128x128xf32>, vector<8x128xf32> -> vector<8x128xf32>
    %33 = arith.index_cast %c1_i32 : i32 to index
    %c0_27 = arith.constant 0 : index
    %c0_28 = arith.constant 0 : index
    %34 = vector.load %arg8[%33, %c0_27, %c0_28] : memref<4x8x128xf32, #tpu.memory_space<vmem>>, vector<1x8x128xf32>
    %35 = vector.shape_cast %34 : vector<1x8x128xf32> to vector<8x128xf32>
    %36 = vector.shape_cast %32 : vector<8x128xf32> to vector<1x8x128xf32>
    tpu.vector_store %arg8[%33, %c0_27, %c0_28], %36 {strides = array<i32>} : memref<4x8x128xf32, #tpu.memory_space<vmem>>, vector<1x8x128xf32>,
    %c2_i32 = arith.constant 2 : i32
    %37 = arith.index_cast %c2_i32 : i32 to index
    %c0_29 = arith.constant 0 : index
    %c0_30 = arith.constant 0 : index
    %38 = vector.load %arg10[%37, %c0_29, %c0_30] : memref<4x8x128xf32, #tpu.memory_space<vmem>>, vector<1x8x128xf32>
    %39 = vector.shape_cast %38 : vector<1x8x128xf32> to vector<8x128xf32>
    %cst_31 = arith.constant dense<0.000000e+00> : vector<8x128xf32>
    %40 = tpu.matmul %31, %12, %cst_31 {dimension_numbers = #tpu.dot_dimension_numbers<[1], [0], [0], [1], [0, 0, 1, 1], [], []>} : vector<8x128xf32>, vector<128x128xf32>, vector<8x128xf32> -> vector<8x128xf32>
    %41 = arith.addf %39, %40 : vector<8x128xf32>
    %42 = math.tanh %41 : vector<8x128xf32>
    %cst_32 = arith.constant dense<0.000000e+00> : vector<8x128xf32>
    %43 = tpu.matmul %42, %13, %cst_32 {dimension_numbers = #tpu.dot_dimension_numbers<[1], [0], [0], [1], [0, 0, 1, 1], [], []>} : vector<8x128xf32>, vector<128x128xf32>, vector<8x128xf32> -> vector<8x128xf32>
    %44 = arith.index_cast %c2_i32 : i32 to index
    %c0_33 = arith.constant 0 : index
    %c0_34 = arith.constant 0 : index
    %45 = vector.load %arg8[%44, %c0_33, %c0_34] : memref<4x8x128xf32, #tpu.memory_space<vmem>>, vector<1x8x128xf32>
    %46 = vector.shape_cast %45 : vector<1x8x128xf32> to vector<8x128xf32>
    %47 = vector.shape_cast %43 : vector<8x128xf32> to vector<1x8x128xf32>
    tpu.vector_store %arg8[%44, %c0_33, %c0_34], %47 {strides = array<i32>} : memref<4x8x128xf32, #tpu.memory_space<vmem>>, vector<1x8x128xf32>,
    %c3_i32 = arith.constant 3 : i32
    %48 = arith.index_cast %c3_i32 : i32 to index
    %c0_35 = arith.constant 0 : index
    %c0_36 = arith.constant 0 : index
    %49 = vector.load %arg10[%48, %c0_35, %c0_36] : memref<4x8x128xf32, #tpu.memory_space<vmem>>, vector<1x8x128xf32>
    %50 = vector.shape_cast %49 : vector<1x8x128xf32> to vector<8x128xf32>
    %cst_37 = arith.constant dense<0.000000e+00> : vector<8x128xf32>
    %51 = tpu.matmul %42, %12, %cst_37 {dimension_numbers = #tpu.dot_dimension_numbers<[1], [0], [0], [1], [0, 0, 1, 1], [], []>} : vector<8x128xf32>, vector<128x128xf32>, vector<8x128xf32> -> vector<8x128xf32>
    %52 = arith.addf %50, %51 : vector<8x128xf32>
    %53 = math.tanh %52 : vector<8x128xf32>
    %cst_38 = arith.constant dense<0.000000e+00> : vector<8x128xf32>
    %54 = tpu.matmul %53, %13, %cst_38 {dimension_numbers = #tpu.dot_dimension_numbers<[1], [0], [0], [1], [0, 0, 1, 1], [], []>} : vector<8x128xf32>, vector<128x128xf32>, vector<8x128xf32> -> vector<8x128xf32>
    %55 = arith.index_cast %c3_i32 : i32 to index
    %c0_39 = arith.constant 0 : index
    %c0_40 = arith.constant 0 : index
    %56 = vector.load %arg8[%55, %c0_39, %c0_40] : memref<4x8x128xf32, #tpu.memory_space<vmem>>, vector<1x8x128xf32>
    %57 = vector.shape_cast %56 : vector<1x8x128xf32> to vector<8x128xf32>
    %58 = vector.shape_cast %54 : vector<8x128xf32> to vector<1x8x128xf32>
    tpu.vector_store %arg8[%55, %c0_39, %c0_40], %58 {strides = array<i32>} : memref<4x8x128xf32, #tpu.memory_space<vmem>>, vector<1x8x128xf32>,
    %c4_i32 = arith.constant 4 : i32
    %c0_41 = arith.constant 0 : index
    %c0_42 = arith.constant 0 : index
    %59 = vector.load %arg11[%c0_41, %c0_42] : memref<8x128xf32, #tpu.memory_space<vmem>>, vector<8x128xf32>
    tpu.vector_store %arg11[%c0_41, %c0_42], %53 {strides = array<i32>} : memref<8x128xf32, #tpu.memory_space<vmem>>, vector<8x128xf32>,
    %c1_i32_43 = arith.constant 1 : i32
    %60 = arith.cmpi eq, %arg1, %c1_i32_43 : i32
    %61 = arith.extui %60 : i1 to i32
    %c0_i32_44 = arith.constant 0 : i32
    %62 = arith.cmpi ne, %61, %c0_i32_44 : i32
    scf.if %62 {
      %c0_45 = arith.constant 0 : index
      %c0_46 = arith.constant 0 : index
      %63 = vector.load %arg9[%c0_45, %c0_46] : memref<8x128xf32, #tpu.memory_space<vmem>>, vector<8x128xf32>
      tpu.vector_store %arg9[%c0_45, %c0_46], %53 {strides = array<i32>} : memref<8x128xf32, #tpu.memory_space<vmem>>, vector<8x128xf32>,
    } else {
    }
    return
  }
  func.func @transform_0(%arg0: i32, %arg1: i32) -> (i32, i32, i32) {
    %c0_i32 = arith.constant 0 : i32
    %c0_i32_0 = arith.constant 0 : i32
    return %arg1, %arg0, %c0_i32 : i32, i32, i32
  }
  func.func @transform_1(%arg0: i32, %arg1: i32) -> (i32, i32) {
    %c0_i32 = arith.constant 0 : i32
    %c0_i32_0 = arith.constant 0 : i32
    return %arg0, %c0_i32 : i32, i32
  }
  func.func @transform_2(%arg0: i32, %arg1: i32) -> (i32, i32) {
    %c0_i32 = arith.constant 0 : i32
    %c0_i32_0 = arith.constant 0 : i32
    %c0_i32_1 = arith.constant 0 : i32
    return %c0_i32, %c0_i32_0 : i32, i32
  }
  func.func @transform_3(%arg0: i32, %arg1: i32) -> (i32, i32) {
    %c0_i32 = arith.constant 0 : i32
    %c0_i32_0 = arith.constant 0 : i32
    %c0_i32_1 = arith.constant 0 : i32
    return %c0_i32, %c0_i32_0 : i32, i32
  }
  func.func @transform_4(%arg0: i32, %arg1: i32) -> (i32, i32) {
    %c0_i32 = arith.constant 0 : i32
    %c0_i32_0 = arith.constant 0 : i32
    %c0_i32_1 = arith.constant 0 : i32
    return %c0_i32, %c0_i32_0 : i32, i32
  }
  func.func @transform_5(%arg0: i32, %arg1: i32) -> (i32, i32) {
    %c0_i32 = arith.constant 0 : i32
    %c0_i32_0 = arith.constant 0 : i32
    %c0_i32_1 = arith.constant 0 : i32
    return %c0_i32, %c0_i32_0 : i32, i32
  }
  func.func @transform_6(%arg0: i32, %arg1: i32) -> (i32, i32, i32) {
    %c0_i32 = arith.constant 0 : i32
    %c0_i32_0 = arith.constant 0 : i32
    return %arg1, %arg0, %c0_i32 : i32, i32, i32
  }
  func.func @transform_7(%arg0: i32, %arg1: i32) -> (i32, i32) {
    %c0_i32 = arith.constant 0 : i32
    %c0_i32_0 = arith.constant 0 : i32
    return %arg0, %c0_i32 : i32, i32
  }
}

</mosaic_0001>

<llo_original>
// kernel: tpu_custom_call.1
$region0: #{tpu_custom_call.1}
  #allocation0 [shape = 'u32[]', space=smem, size = 0x4, offset = 0x4, fixed_abs, tag = 'smem constant byte address 0x4 - core index']
  #allocation1 [shape = 'u32[144,128]{1,0:T(1,128)}', space=vmem, size = 0x12000, scoped, tag = 'internal scratch']
  #allocation2 [shape = 'f32[4,8,128]{2,1,0:T(8,128)}', space=vmem, size = 0x4000, scoped, tag = 'scratch operand']
  #allocation3 [shape = 'f32[8,128]{1,0:T(8,128)}', space=vmem, size = 0x1000, scoped, tag = 'scratch operand']
  %s0 = inlined_call_operand.hbm [shape: f32[8,8,128], index: 0, kind: input, shape index: {}]
  %s1 = inlined_call_operand.hbm [shape: f32[8,128], index: 1, kind: input, shape index: {}]
  %s2 = inlined_call_operand.hbm [shape: f32[128,128], index: 2, kind: input, shape index: {}]
  %s3 = inlined_call_operand.hbm [shape: f32[128,128], index: 3, kind: input, shape index: {}]
  %s4 = inlined_call_operand.vmem [shape: f32[1,128], index: 4, kind: input, shape index: {}]
  %s5 = inlined_call_operand.hbm [shape: f32[128,128], index: 5, kind: input, shape index: {}]
  %s6 = inlined_call_operand.hbm [shape: f32[8,8,128], index: 6, kind: output, shape index: {0}]
  %s7 = inlined_call_operand.hbm [shape: f32[8,128], index: 7, kind: output, shape index: {1}]
  %8 = xla_tuple %s6, %s7
  %s9 = sld [smem:[#allocation0]]
  $region93: #{tpu_custom_call.1} parent=0
    _
  %s11 = ssub.s32 1, %s9
  %s12 = scalar_select 0, %s11, %s9
  $region1: #{tpu_custom_call.1} parent=0
    #allocation4 [shape = 'u8[32768]{0}', space=vmem, size = 0x8000, scoped, tag = 'input window, operand 0']
    #allocation5 [shape = 's32[2]{0}', space=sflag, size = 0x8, scoped, tag = 'scoped memory for tpu_custom_call.1']
    #allocation6 [shape = 's32[2]{0}', space=sflag, size = 0x8, scoped, tag = 'scoped memory for tpu_custom_call.1']
    #allocation7 [shape = 'u8[4096]{0}', space=vmem, size = 0x1000, scoped, tag = 'input window, operand 1, single buffered']
    #allocation8 [shape = 's32[1]{0}', space=sflag, size = 0x4, scoped, tag = 'scoped memory for tpu_custom_call.1']
    #allocation9 [shape = 'u8[65536]{0}', space=vmem, size = 0x10000, scoped, tag = 'input window, operand 2, single buffered']
    #allocation10 [shape = 'u8[65536]{0}', space=vmem, size = 0x10000, scoped, tag = 'input window, operand 3, single buffered']
    #allocation11 [shape = 's32[1]{0}', space=sflag, size = 0x4, scoped, tag = 'scoped memory for tpu_custom_call.1']
    #allocation12 [shape = 'u8[65536]{0}', space=vmem, size = 0x10000, scoped, tag = 'input window, operand 5, single buffered']
    #allocation13 [shape = 'u8[32768]{0}', space=vmem, size = 0x8000, scoped, tag = 'output window, operand 0']
    #allocation14 [shape = 'u8[4096]{0}', space=vmem, size = 0x1000, scoped, tag = 'output window, operand 1, single buffered']
    #allocation15 [shape = 's32[1]{0}', space=sflag, size = 0x4, scoped, tag = 'scoped memory for tpu_custom_call.1']
    %13 = vsyncpa [#allocation5], 0
    %s14 = scalar_lea.sflag [#allocation5], 1
    %15 = vsyncpa %s14, 0
    %16 = vsyncpa [#allocation8], 0
    %17 = vsyncpa [#allocation11], 0
    %18 = vsyncpa [#allocation6], 0
    %s19 = scalar_lea.sflag [#allocation6], 1
    %20 = vsyncpa %s19, 0
    %21 = vsyncpa [#allocation15], 0
    loop: start=0, step=1, limit=4
    $region2: #{tpu_custom_call.1} parent=1 // loop_pre_header
      _
    $region3: #{tpu_custom_call.1} parent=1 // loop_header
      %s23 = sphi 0, %s27
      %p24 = scmp.ge.s32.totalorder %s23, 4
      %s30 = sphi 0, %s42
      %s31 = sphi 0, %s38
      %s32 = sphi 0, %s30
      %s33 = sphi 0, %s31
      %s34 = sphi 0, %s32
      %s35 = sphi 0, %s33
      %s47 = sphi 0, %s49
      %s50 = sphi 0, %s47
      %s51 = sphi 0, %s50
      %s67 = sphi 0, %s51
      %s73 = sphi 0, %s75
      %s76 = sphi 0, %s73
      %s77 = sphi 0, %s76
      %s93 = sphi 0, %s77
      %s97 = sphi 0, %s97
      %s99 = sphi 0, %s97
      %s100 = sphi 0, %s99
      %s114 = sphi 0, %s100
      %s118 = sphi 0, %s118
      %s120 = sphi 0, %s118
      %s121 = sphi 0, %s120
      %s135 = sphi 0, %s121
      %s139 = sphi 0, %s139
      %s141 = sphi 0, %s139
      %s142 = sphi 0, %s141
      %s156 = sphi 0, %s142
      %s160 = sphi 0, %s160
      %s162 = sphi 0, %s160
      %s163 = sphi 0, %s162
      %s177 = sphi 0, %s163
      %s185 = sphi 0, %s187
      %s188 = sphi 0, %s185
      %s189 = sphi 0, %s188
      %s205 = sphi 0, %s189
      %s211 = sphi 0, %s213
      %s214 = sphi 0, %s211
      %s215 = sphi 0, %s214
      %s231 = sphi 0, %s215
    $region4: #{tpu_custom_call.1} parent=1 // loop_header_branch
      %26 = sbr.rel (%p24) target = $region8
    $region5: #{tpu_custom_call.1} parent=1 // loop_body
      %s28 = ssub.s32 %s23, 1
      %s29 = ssub.s32 %s23, 2
      %s36 = sadd.s32 1, %s31
      %p37 = scmp.ge.s32.totalorder %s36, 2
      %s38 = scalar_select %p37, 0, %s36
      %s39 = sadd.s32 1, %s30
      %s40 = scalar_select %p37, %s39, %s30
      %p41 = scmp.ge.s32.totalorder %s40, 1
      %s42 = scalar_select %p41, 0, %s40
      %s43 = ssub.s32 %s31, %s38
      %s44 = ssub.s32 %s30, %s42
      %s45 = sor.u32 %s43, %s44
      %p46 = scmp.eq.s32.totalorder %s45, 0
      %s48 = sadd.s32 %s47, 1
      %s49 = scalar_select %p46, %s47, %s48
      %p52 = pneg %p46
      %p53 = scmp.eq.s32.totalorder %s23, 1
      %p54 = por %p52, %p53
      %p55 = scmp.ne.s32.totalorder %s47, %s50
      %p56 = scmp.eq.s32.totalorder %s23, 0
      %p57 = por %p55, %p56
      %p58 = scmp.ne.s32.totalorder %s47, %s50
      %p59 = scmp.eq.s32.totalorder %s28, 1
      %p60 = por %p58, %p59
      %p61 = scmp.ne.s32.totalorder %s50, %s51
      %p62 = scmp.eq.s32.totalorder %s28, 0
      %p63 = por %p61, %p62
      %p64 = scmp.ne.s32.totalorder %s50, %s51
      %p65 = scmp.eq.s32.totalorder %s29, 1
      %p66 = por %p64, %p65
      %p68 = scmp.ne.s32.totalorder %s51, %s67
      %p69 = scmp.eq.s32.totalorder %s29, 0
      %p70 = por %p68, %p69
      %s71 = ssub.s32 %s30, %s42
      %p72 = scmp.eq.s32.totalorder %s71, 0
      %s74 = sadd.s32 %s73, 1
      %s75 = scalar_select %p72, %s73, %s74
      %p78 = pneg %p72
      %p79 = scmp.eq.s32.totalorder %s23, 1
      %p80 = por %p78, %p79
      %p81 = scmp.ne.s32.totalorder %s73, %s76
      %p82 = scmp.eq.s32.totalorder %s23, 0
      %p83 = por %p81, %p82
      %p84 = scmp.ne.s32.totalorder %s73, %s76
      %p85 = scmp.eq.s32.totalorder %s28, 1
      %p86 = por %p84, %p85
      %p87 = scmp.ne.s32.totalorder %s76, %s77
      %p88 = scmp.eq.s32.totalorder %s28, 0
      %p89 = por %p87, %p88
      %p90 = scmp.ne.s32.totalorder %s76, %s77
      %p91 = scmp.eq.s32.totalorder %s29, 1
      %p92 = por %p90, %p91
      %p94 = scmp.ne.s32.totalorder %s77, %s93
      %p95 = scmp.eq.s32.totalorder %s29, 0
      %p96 = por %p94, %p95
      %s98 = sadd.s32 %s97, 1
      %p101 = scmp.eq.s32.totalorder %s23, 1
      %p102 = scmp.ne.s32.totalorder %s97, %s99
      %p103 = scmp.eq.s32.totalorder %s23, 0
      %p104 = por %p102, %p103
      %p105 = scmp.ne.s32.totalorder %s97, %s99
      %p106 = scmp.eq.s32.totalorder %s28, 1
      %p107 = por %p105, %p106
      %p108 = scmp.ne.s32.totalorder %s99, %s100
      %p109 = scmp.eq.s32.totalorder %s28, 0
      %p110 = por %p108, %p109
      %p111 = scmp.ne.s32.totalorder %s99, %s100
      %p112 = scmp.eq.s32.totalorder %s29, 1
      %p113 = por %p111, %p112
      %p115 = scmp.ne.s32.totalorder %s100, %s114
      %p116 = scmp.eq.s32.totalorder %s29, 0
      %p117 = por %p115, %p116
      %s119 = sadd.s32 %s118, 1
      %p122 = scmp.eq.s32.totalorder %s23, 1
      %p123 = scmp.ne.s32.totalorder %s118, %s120
      %p124 = scmp.eq.s32.totalorder %s23, 0
      %p125 = por %p123, %p124
      %p126 = scmp.ne.s32.totalorder %s118, %s120
      %p127 = scmp.eq.s32.totalorder %s28, 1
      %p128 = por %p126, %p127
      %p129 = scmp.ne.s32.totalorder %s120, %s121
      %p130 = scmp.eq.s32.totalorder %s28, 0
      %p131 = por %p129, %p130
      %p132 = scmp.ne.s32.totalorder %s120, %s121
      %p133 = scmp.eq.s32.totalorder %s29, 1
      %p134 = por %p132, %p133
      %p136 = scmp.ne.s32.totalorder %s121, %s135
      %p137 = scmp.eq.s32.totalorder %s29, 0
      %p138 = por %p136, %p137
      %s140 = sadd.s32 %s139, 1
      %p143 = scmp.eq.s32.totalorder %s23, 1
      %p144 = scmp.ne.s32.totalorder %s139, %s141
      %p145 = scmp.eq.s32.totalorder %s23, 0
      %p146 = por %p144, %p145
      %p147 = scmp.ne.s32.totalorder %s139, %s141
      %p148 = scmp.eq.s32.totalorder %s28, 1
      %p149 = por %p147, %p148
      %p150 = scmp.ne.s32.totalorder %s141, %s142
      %p151 = scmp.eq.s32.totalorder %s28, 0
      %p152 = por %p150, %p151
      %p153 = scmp.ne.s32.totalorder %s141, %s142
      %p154 = scmp.eq.s32.totalorder %s29, 1
      %p155 = por %p153, %p154
      %p157 = scmp.ne.s32.totalorder %s142, %s156
      %p158 = scmp.eq.s32.totalorder %s29, 0
      %p159 = por %p157, %p158
      %s161 = sadd.s32 %s160, 1
      %p164 = scmp.eq.s32.totalorder %s23, 1
      %p165 = scmp.ne.s32.totalorder %s160, %s162
      %p166 = scmp.eq.s32.totalorder %s23, 0
      %p167 = por %p165, %p166
      %p168 = scmp.ne.s32.totalorder %s160, %s162
      %p169 = scmp.eq.s32.totalorder %s28, 1
      %p170 = por %p168, %p169
      %p171 = scmp.ne.s32.totalorder %s162, %s163
      %p172 = scmp.eq.s32.totalorder %s28, 0
      %p173 = por %p171, %p172
      %p174 = scmp.ne.s32.totalorder %s162, %s163
      %p175 = scmp.eq.s32.totalorder %s29, 1
      %p176 = por %p174, %p175
      %p178 = scmp.ne.s32.totalorder %s163, %s177
      %p179 = scmp.eq.s32.totalorder %s29, 0
      %p180 = por %p178, %p179
      %s181 = ssub.s32 %s31, %s38
      %s182 = ssub.s32 %s30, %s42
      %s183 = sor.u32 %s181, %s182
      %p184 = scmp.eq.s32.totalorder %s183, 0
      %s186 = sadd.s32 %s185, 1
      %s187 = scalar_select %p184, %s185, %s186
      %p190 = pneg %p184
      %p191 = scmp.eq.s32.totalorder %s23, 1
      %p192 = por %p190, %p191
      %p193 = scmp.ne.s32.totalorder %s185, %s188
      %p194 = scmp.eq.s32.totalorder %s23, 0
      %p195 = por %p193, %p194
      %p196 = scmp.ne.s32.totalorder %s185, %s188
      %p197 = scmp.eq.s32.totalorder %s28, 1
      %p198 = por %p196, %p197
      %p199 = scmp.ne.s32.totalorder %s188, %s189
      %p200 = scmp.eq.s32.totalorder %s28, 0
      %p201 = por %p199, %p200
      %p202 = scmp.ne.s32.totalorder %s188, %s189
      %p203 = scmp.eq.s32.totalorder %s29, 1
      %p204 = por %p202, %p203
      %p206 = scmp.ne.s32.totalorder %s189, %s205
      %p207 = scmp.eq.s32.totalorder %s29, 0
      %p208 = por %p206, %p207
      %s209 = ssub.s32 %s30, %s42
      %p210 = scmp.eq.s32.totalorder %s209, 0
      %s212 = sadd.s32 %s211, 1
      %s213 = scalar_select %p210, %s211, %s212
      %p216 = pneg %p210
      %p217 = scmp.eq.s32.totalorder %s23, 1
      %p218 = por %p216, %p217
      %p219 = scmp.ne.s32.totalorder %s211, %s214
      %p220 = scmp.eq.s32.totalorder %s23, 0
      %p221 = por %p219, %p220
      %p222 = scmp.ne.s32.totalorder %s211, %s214
      %p223 = scmp.eq.s32.totalorder %s28, 1
      %p224 = por %p222, %p223
      %p225 = scmp.ne.s32.totalorder %s214, %s215
      %p226 = scmp.eq.s32.totalorder %s28, 0
      %p227 = por %p225, %p226
      %p228 = scmp.ne.s32.totalorder %s214, %s215
      %p229 = scmp.eq.s32.totalorder %s29, 1
      %p230 = por %p228, %p229
      %p232 = scmp.ne.s32.totalorder %s215, %s231
      %p233 = scmp.eq.s32.totalorder %s29, 0
      %p234 = por %p232, %p233
      %p235 = scmp.le.s32.totalorder 1, %s23
      %p236 = scmp.lt.s32.totalorder %s23, 3
      %p237 = pnand %p235, %p236
      %p238 = pneg %p237
      // Predicated region
      $region9: #{tpu_custom_call.1} parent=5 // pred_check
        _
      $region10: #{tpu_custom_call.1} parent=5 // pred_check_branch
        %240 = sbr.rel (%p237) target = $region12
      $region11: #{tpu_custom_call.1} parent=5 // pred_region
        %s241 = ssub.s32 %s23, 1
        // Predicated region
        $region13: #{tpu_custom_call.1} parent=11 // pred_check
          %p242 = pneg %p89
        $region14: #{tpu_custom_call.1} parent=11 // pred_check_branch
          %244 = sbr.rel (%p242) target = $region16
        $region15: #{tpu_custom_call.1} parent=11 // pred_region
          %s246 = ssub.s32 128, 128
          %247 = vsyncadd [#allocation8], %s246
          %s248 = smul.addr %s32, 128
          %s249 = scalar_lea.hbm %s1, %s248
          %s251 = sshll.u32 [#allocation7], 4
          %s252 = int_to_ptr.vmem [resolvable:$true] %s251
          %254 = dma.hbm_to_vmem [thread:$0]  %s249, 128, %s252, [#allocation8]
        $region16: #{tpu_custom_call.1} parent=11 // pred_fallthru
          _
        // Predicated region
        $region17: #{tpu_custom_call.1} parent=11 // pred_check
          %p255 = pneg %p110
        $region18: #{tpu_custom_call.1} parent=11 // pred_check_branch
          %257 = sbr.rel (%p255) target = $region20
        $region19: #{tpu_custom_call.1} parent=11 // pred_region
          %s259 = ssub.s32 2048, 2048
          %260 = vsyncadd [#allocation8], %s259
          %s261 = sshll.u32 [#allocation9], 4
          %s262 = int_to_ptr.vmem [resolvable:$true] %s261
          %267 = dma.hbm_to_vmem [thread:$0]  %s2, 2048, %s262, [#allocation8], 128, 128, 8
        $region20: #{tpu_custom_call.1} parent=11 // pred_fallthru
          _
        // Predicated region
        $region21: #{tpu_custom_call.1} parent=11 // pred_check
          %p268 = pneg %p131
        $region22: #{tpu_custom_call.1} parent=11 // pred_check_branch
          %270 = sbr.rel (%p268) target = $region24
        $region23: #{tpu_custom_call.1} parent=11 // pred_region
          %s272 = ssub.s32 2048, 2048
          %273 = vsyncadd [#allocation11], %s272
          %s274 = sshll.u32 [#allocation10], 4
          %s275 = int_to_ptr.vmem [resolvable:$true] %s274
          %280 = dma.hbm_to_vmem [thread:$0]  %s3, 2048, %s275, [#allocation11], 128, 128, 8
        $region24: #{tpu_custom_call.1} parent=11 // pred_fallthru
          _
        // Predicated region
        $region25: #{tpu_custom_call.1} parent=11 // pred_check
          %p281 = pneg %p152
        $region26: #{tpu_custom_call.1} parent=11 // pred_check_branch
          %283 = sbr.rel (%p281) target = $region28
        $region27: #{tpu_custom_call.1} parent=11 // pred_region
          _
        $region28: #{tpu_custom_call.1} parent=11 // pred_fallthru
          _
        // Predicated region
        $region29: #{tpu_custom_call.1} parent=11 // pred_check
          %p284 = pneg %p173
        $region30: #{tpu_custom_call.1} parent=11 // pred_check_branch
          %286 = sbr.rel (%p284) target = $region32
        $region31: #{tpu_custom_call.1} parent=11 // pred_region
          %s288 = ssub.s32 2048, 2048
          %289 = vsyncadd [#allocation11], %s288
          %s290 = sshll.u32 [#allocation12], 4
          %s291 = int_to_ptr.vmem [resolvable:$true] %s290
          %296 = dma.hbm_to_vmem [thread:$0]  %s5, 2048, %s291, [#allocation11], 128, 128, 8
        $region32: #{tpu_custom_call.1} parent=11 // pred_fallthru
          _
      $region12: #{tpu_custom_call.1} parent=5 // pred_fallthru
        _
      %p297 = scmp.lt.s32.totalorder %s23, 2
      // Predicated region
      $region33: #{tpu_custom_call.1} parent=5 // pred_check
        %p298 = pneg %p297
      $region34: #{tpu_custom_call.1} parent=5 // pred_check_branch
        %300 = sbr.rel (%p298) target = $region36
      $region35: #{tpu_custom_call.1} parent=5 // pred_region
        // Predicated region
        $region37: #{tpu_custom_call.1} parent=35 // pred_check
          %p301 = pneg %p57
        $region38: #{tpu_custom_call.1} parent=35 // pred_check_branch
          %303 = sbr.rel (%p301) target = $region40
        $region39: #{tpu_custom_call.1} parent=35 // pred_region
          %s304 = sand.u32 %s47, 1
          %s305 = scalar_lea.sflag [#allocation5], %s304
          %s306 = sand.u32 %s47, 1
          %s307 = smul.addr %s306, 32
          %s308 = scalar_lea.vmem [#allocation4], %s307
          %s309 = smul.u32 4, %s31
          %s311 = ssub.s32 512, 512
          %312 = vsyncadd %s305, %s311
          %s313 = sadd.s32 %s30, %s309
          %s314 = smul.addr %s313, 128
          %s315 = scalar_lea.hbm %s0, %s314
          %s316 = sshll.u32 %s308, 4
          %s317 = int_to_ptr.vmem [resolvable:$true] %s316
          %322 = dma.hbm_to_vmem [thread:$0]  %s315, 512, %s317, %s305, 128, 128, 8
        $region40: #{tpu_custom_call.1} parent=35 // pred_fallthru
          _
      $region36: #{tpu_custom_call.1} parent=5 // pred_fallthru
        _
      %p323 = scmp.le.s32.totalorder 1, %s23
      %p324 = scmp.lt.s32.totalorder %s23, 3
      %p325 = pnand %p323, %p324
      %p326 = pneg %p325
      // Predicated region
      $region41: #{tpu_custom_call.1} parent=5 // pred_check
        _
      $region42: #{tpu_custom_call.1} parent=5 // pred_check_branch
        %328 = sbr.rel (%p325) target = $region44
      $region43: #{tpu_custom_call.1} parent=5 // pred_region
        %s329 = ssub.s32 %s23, 1
        %s330 = sand.u32 %s50, 1
        %s331 = scalar_lea.sflag [#allocation5], %s330
        %s332 = sand.u32 %s50, 1
        %s333 = smul.addr %s332, 32
        %s334 = scalar_lea.vmem [#allocation4], %s333
        // Predicated region
        $region45: #{tpu_custom_call.1} parent=43 // pred_check
          %p335 = pneg %p63
        $region46: #{tpu_custom_call.1} parent=43 // pred_check_branch
          %337 = sbr.rel (%p335) target = $region48
        $region47: #{tpu_custom_call.1} parent=43 // pred_region
          %338 = dma.done %s331, 512
        $region48: #{tpu_custom_call.1} parent=43 // pred_fallthru
          _
        // Predicated region
        $region49: #{tpu_custom_call.1} parent=43 // pred_check
          %p339 = pneg %p89
        $region50: #{tpu_custom_call.1} parent=43 // pred_check_branch
          %341 = sbr.rel (%p339) target = $region52
        $region51: #{tpu_custom_call.1} parent=43 // pred_region
          %342 = dma.done [#allocation8], 128
        $region52: #{tpu_custom_call.1} parent=43 // pred_fallthru
          _
        // Predicated region
        $region53: #{tpu_custom_call.1} parent=43 // pred_check
          %p343 = pneg %p110
        $region54: #{tpu_custom_call.1} parent=43 // pred_check_branch
          %345 = sbr.rel (%p343) target = $region56
        $region55: #{tpu_custom_call.1} parent=43 // pred_region
          %346 = dma.done [#allocation8], 2048
        $region56: #{tpu_custom_call.1} parent=43 // pred_fallthru
          _
        // Predicated region
        $region57: #{tpu_custom_call.1} parent=43 // pred_check
          %p347 = pneg %p131
        $region58: #{tpu_custom_call.1} parent=43 // pred_check_branch
          %349 = sbr.rel (%p347) target = $region60
        $region59: #{tpu_custom_call.1} parent=43 // pred_region
          %350 = dma.done [#allocation11], 2048
        $region60: #{tpu_custom_call.1} parent=43 // pred_fallthru
          _
        // Predicated region
        $region61: #{tpu_custom_call.1} parent=43 // pred_check
          %p351 = pneg %p173
        $region62: #{tpu_custom_call.1} parent=43 // pred_check_branch
          %353 = sbr.rel (%p351) target = $region64
        $region63: #{tpu_custom_call.1} parent=43 // pred_region
          %354 = dma.done [#allocation11], 2048
        $region64: #{tpu_custom_call.1} parent=43 // pred_fallthru
          _
        %s355 = sand.u32 %s50, 1
        %s356 = scalar_lea.sflag [#allocation5], %s355
        %s357 = sand.u32 %s50, 1
        %s358 = smul.addr %s357, 32
        %s359 = scalar_lea.vmem [#allocation4], %s358
        %p360 = pneg %p63
        %p361 = pneg %p60
        %p362 = pneg %p89
        %p363 = pneg %p86
        %p364 = pneg %p110
        %p365 = pneg %p107
        %p366 = pneg %p131
        %p367 = pneg %p128
        %p368 = pneg %p152
        %p369 = pneg %p149
        %p370 = pneg %p173
        %p371 = pneg %p170
        %p372 = pneg %p201
        %p373 = pneg %p198
        %s374 = sand.u32 %s188, 1
        %s375 = scalar_lea.sflag [#allocation6], %s374
        %s376 = sand.u32 %s188, 1
        %s377 = smul.addr %s376, 32
        %s378 = scalar_lea.vmem [#allocation13], %s377
        %p379 = pneg %p227
        %p380 = pneg %p224
        %s381 = smul.u32 4, %s33
        %s382 = smul.u32 4, %s33
        %p383 = scmp.eq.s32.totalorder %s33, 0
        // Predicated region
        $region65: #{tpu_custom_call.1} parent=43 // pred_check
          %p384 = pneg %p383
        $region66: #{tpu_custom_call.1} parent=43 // pred_check_branch
          %386 = sbr.rel (%p384) target = $region68
        $region67: #{tpu_custom_call.1} parent=43 // pred_region
          %v387 = vld [vmem:[#allocation7] sm:$0xff]
          %388 = vst [vmem:[#allocation3] sm:$0xff] %v387
        $region68: #{tpu_custom_call.1} parent=43 // pred_fallthru
          _
        %v389 = vld [vmem:[%s334] sm:$0xff]
        %v390 = vld [vmem:[%s334 + $0x8] sm:$0xff]
        %v391 = vld [vmem:[%s334 + $0x10] sm:$0xff]
        %v392 = vld [vmem:[%s334 + $0x18] sm:$0xff]
        %v393 = vld [vmem:[#allocation9] sm:$0xff]
        %v394 = vld [vmem:[#allocation9 + $0x8] sm:$0xff]
        %v395 = vld [vmem:[#allocation9 + $0x10] sm:$0xff]
        %v396 = vld [vmem:[#allocation9 + $0x18] sm:$0xff]
        %v397 = vld [vmem:[#allocation9 + $0x20] sm:$0xff]
        %v398 = vld [vmem:[#allocation9 + $0x28] sm:$0xff]
        %v399 = vld [vmem:[#allocation9 + $0x30] sm:$0xff]
        %v400 = vld [vmem:[#allocation9 + $0x38] sm:$0xff]
        %v401 = vld [vmem:[#allocation9 + $0x40] sm:$0xff]
        %v402 = vld [vmem:[#allocation9 + $0x48] sm:$0xff]
        %v403 = vld [vmem:[#allocation9 + $0x50] sm:$0xff]
        %v404 = vld [vmem:[#allocation9 + $0x58] sm:$0xff]
        %v405 = vld [vmem:[#allocation9 + $0x60] sm:$0xff]
        %v406 = vld [vmem:[#allocation9 + $0x68] sm:$0xff]
        %v407 = vld [vmem:[#allocation9 + $0x70] sm:$0xff]
        %v408 = vld [vmem:[#allocation9 + $0x78] sm:$0xff]
        %v409 = vld [vmem:[%s4] sm:$0x1]
        %v411 = vlaneseq
        %v412 = vshrl.u32 %v411, 7
        %v413 = vsub.s32 0, %v412
        %v414 = vrot.slane %v409, %v413
        %416 = vmatprep.subr.mxu0 0.0
        %417 = vmatpush1.msra.mxu0 %v393
        %418 = vmatprep.subr.mxu0 0.0
        %419 = vmatpush1.msra.mxu0 %v394
        %420 = vmatprep.subr.mxu0 0.0
        %421 = vmatpush1.msra.mxu0 %v395
        %422 = vmatprep.subr.mxu0 0.0
        %423 = vmatpush1.msra.mxu0 %v396
        %424 = vmatprep.subr.mxu0 0.0
        %425 = vmatpush1.msra.mxu0 %v397
        %426 = vmatprep.subr.mxu0 0.0
        %427 = vmatpush1.msra.mxu0 %v398
        %428 = vmatprep.subr.mxu0 0.0
        %429 = vmatpush1.msra.mxu0 %v399
        %430 = vmatprep.subr.mxu0 0.0
        %431 = vmatpush1.msra.mxu0 %v400
        %432 = vmatprep.subr.mxu0 0.0
        %433 = vmatpush1.msra.mxu0 %v401
        %434 = vmatprep.subr.mxu0 0.0
        %435 = vmatpush1.msra.mxu0 %v402
        %436 = vmatprep.subr.mxu0 0.0
        %437 = vmatpush1.msra.mxu0 %v403
        %438 = vmatprep.subr.mxu0 0.0
        %439 = vmatpush1.msra.mxu0 %v404
        %440 = vmatprep.subr.mxu0 0.0
        %441 = vmatpush1.msra.mxu0 %v405
        %442 = vmatprep.subr.mxu0 0.0
        %443 = vmatpush1.msra.mxu0 %v406
        %444 = vmatprep.subr.mxu0 0.0
        %445 = vmatpush1.msra.mxu0 %v407
        %446 = vmatprep.subr.mxu0 0.0
        %447 = vmatpush1.msra.mxu0 %v408
        %448 = vmatprep.subr.mxu0 0.0
        %449 = vmatpush1.msra.mxu0 0.0
        %450 = vmatprep.subr.mxu0 0.0
        %451 = vmatpush1.msra.mxu0 0.0
        %452 = vmatprep.subr.mxu0 0.0
        %453 = vmatpush1.msra.mxu0 0.0
        %454 = vmatprep.subr.mxu0 0.0
        %455 = vmatpush1.msra.mxu0 0.0
        %456 = vmatprep.subr.mxu0 0.0
        %457 = vmatpush1.msra.mxu0 0.0
        %458 = vmatprep.subr.mxu0 0.0
        %459 = vmatpush1.msra.mxu0 0.0
        %460 = vmatprep.subr.mxu0 0.0
        %461 = vmatpush1.msra.mxu0 0.0
        %462 = vmatprep.subr.mxu0 0.0
        %463 = vmatpush1.msra.mxu0 0.0
        %464 = vmatprep.subr.mxu0 0.0
        %465 = vmatpush1.msra.mxu0 0.0
        %466 = vmatprep.subr.mxu0 0.0
        %467 = vmatpush1.msra.mxu0 0.0
        %468 = vmatprep.subr.mxu0 0.0
        %469 = vmatpush1.msra.mxu0 0.0
        %470 = vmatprep.subr.mxu0 0.0
        %471 = vmatpush1.msra.mxu0 0.0
        %472 = vmatprep.subr.mxu0 0.0
        %473 = vmatpush1.msra.mxu0 0.0
        %474 = vmatprep.subr.mxu0 0.0
        %475 = vmatpush1.msra.mxu0 0.0
        %476 = vmatprep.subr.mxu0 0.0
        %477 = vmatpush1.msra.mxu0 0.0
        %478 = vmatprep.subr.mxu0 0.0
        %479 = vmatpush1.msra.mxu0 0.0
        %480 = vmatprep.mubr.f32.mxu0 0.0
        %481 = vmatmul.mubr.f32.gmra.mrb[0].mxu0 %v389
        %v482 = vpop.f32.mrb[0].mxu0
        %v483 = vadd.f32 %v414, %v482
        %v484 = vpop.f32.mrb[0].mxu0
        %485 = vmatprep.mubr.f32.mxu0 0.0
        %486 = vmatmul.mubr.f32.gmra.mrb[0].mxu0 %v390
        %v487 = vpop.f32.mrb[0].mxu0
        %v488 = vadd.f32 %v414, %v487
        %v489 = vpop.f32.mrb[0].mxu0
        %490 = vmatprep.mubr.f32.mxu0 0.0
        %491 = vmatmul.mubr.f32.gmra.mrb[0].mxu0 %v391
        %v492 = vpop.f32.mrb[0].mxu0
        %v493 = vadd.f32 %v414, %v492
        %v494 = vpop.f32.mrb[0].mxu0
        %495 = vmatprep.mubr.f32.mxu0 0.0
        %496 = vmatmul.mubr.f32.gmra.mrb[0].mxu0 %v392
        %v497 = vpop.f32.mrb[0].mxu0
        %v498 = vadd.f32 %v414, %v497
        %v499 = vpop.f32.mrb[0].mxu0
        %500 = vdwg.mxu0
        %501 = vst [vmem:[#allocation2] sm:$0xff] %v483
        %502 = vst [vmem:[#allocation2 + $0x8] sm:$0xff] %v488
        %503 = vst [vmem:[#allocation2 + $0x10] sm:$0xff] %v493
        %504 = vst [vmem:[#allocation2 + $0x18] sm:$0xff] %v498
        %v505 = vld [vmem:[#allocation10] sm:$0xff]
        %v506 = vld [vmem:[#allocation10 + $0x8] sm:$0xff]
        %v507 = vld [vmem:[#allocation10 + $0x10] sm:$0xff]
        %v508 = vld [vmem:[#allocation10 + $0x18] sm:$0xff]
        %v509 = vld [vmem:[#allocation10 + $0x20] sm:$0xff]
        %v510 = vld [vmem:[#allocation10 + $0x28] sm:$0xff]
        %v511 = vld [vmem:[#allocation10 + $0x30] sm:$0xff]
        %v512 = vld [vmem:[#allocation10 + $0x38] sm:$0xff]
        %v513 = vld [vmem:[#allocation10 + $0x40] sm:$0xff]
        %v514 = vld [vmem:[#allocation10 + $0x48] sm:$0xff]
        %v515 = vld [vmem:[#allocation10 + $0x50] sm:$0xff]
        %v516 = vld [vmem:[#allocation10 + $0x58] sm:$0xff]
        %v517 = vld [vmem:[#allocation10 + $0x60] sm:$0xff]
        %v518 = vld [vmem:[#allocation10 + $0x68] sm:$0xff]
        %v519 = vld [vmem:[#allocation10 + $0x70] sm:$0xff]
        %v520 = vld [vmem:[#allocation10 + $0x78] sm:$0xff]
        %v521 = vld [vmem:[#allocation12] sm:$0xff]
        %v522 = vld [vmem:[#allocation12 + $0x8] sm:$0xff]
        %v523 = vld [vmem:[#allocation12 + $0x10] sm:$0xff]
        %v524 = vld [vmem:[#allocation12 + $0x18] sm:$0xff]
        %v525 = vld [vmem:[#allocation12 + $0x20] sm:$0xff]
        %v526 = vld [vmem:[#allocation12 + $0x28] sm:$0xff]
        %v527 = vld [vmem:[#allocation12 + $0x30] sm:$0xff]
        %v528 = vld [vmem:[#allocation12 + $0x38] sm:$0xff]
        %v529 = vld [vmem:[#allocation12 + $0x40] sm:$0xff]
        %v530 = vld [vmem:[#allocation12 + $0x48] sm:$0xff]
        %v531 = vld [vmem:[#allocation12 + $0x50] sm:$0xff]
        %v532 = vld [vmem:[#allocation12 + $0x58] sm:$0xff]
        %v533 = vld [vmem:[#allocation12 + $0x60] sm:$0xff]
        %v534 = vld [vmem:[#allocation12 + $0x68] sm:$0xff]
        %v535 = vld [vmem:[#allocation12 + $0x70] sm:$0xff]
        %v536 = vld [vmem:[#allocation12 + $0x78] sm:$0xff]
        %v537 = vld [vmem:[#allocation3] sm:$0xff]
        %v538 = vld [vmem:[#allocation2] sm:$0xff]
        %539 = vmatprep.subr.mxu0 0.0
        %540 = vmatpush1.msra.mxu0 %v505
        %541 = vmatprep.subr.mxu0 0.0
        %542 = vmatpush1.msra.mxu0 %v506
        %543 = vmatprep.subr.mxu0 0.0
        %544 = vmatpush1.msra.mxu0 %v507
        %545 = vmatprep.subr.mxu0 0.0
        %546 = vmatpush1.msra.mxu0 %v508
        %547 = vmatprep.subr.mxu0 0.0
        %548 = vmatpush1.msra.mxu0 %v509
        %549 = vmatprep.subr.mxu0 0.0
        %550 = vmatpush1.msra.mxu0 %v510
        %551 = vmatprep.subr.mxu0 0.0
        %552 = vmatpush1.msra.mxu0 %v511
        %553 = vmatprep.subr.mxu0 0.0
        %554 = vmatpush1.msra.mxu0 %v512
        %555 = vmatprep.subr.mxu0 0.0
        %556 = vmatpush1.msra.mxu0 %v513
        %557 = vmatprep.subr.mxu0 0.0
        %558 = vmatpush1.msra.mxu0 %v514
        %559 = vmatprep.subr.mxu0 0.0
        %560 = vmatpush1.msra.mxu0 %v515
        %561 = vmatprep.subr.mxu0 0.0
        %562 = vmatpush1.msra.mxu0 %v516
        %563 = vmatprep.subr.mxu0 0.0
        %564 = vmatpush1.msra.mxu0 %v517
        %565 = vmatprep.subr.mxu0 0.0
        %566 = vmatpush1.msra.mxu0 %v518
        %567 = vmatprep.subr.mxu0 0.0
        %568 = vmatpush1.msra.mxu0 %v519
        %569 = vmatprep.subr.mxu0 0.0
        %570 = vmatpush1.msra.mxu0 %v520
        %571 = vmatprep.subr.mxu0 0.0
        %572 = vmatpush1.msra.mxu0 0.0
        %573 = vmatprep.subr.mxu0 0.0
        %574 = vmatpush1.msra.mxu0 0.0
        %575 = vmatprep.subr.mxu0 0.0
        %576 = vmatpush1.msra.mxu0 0.0
        %577 = vmatprep.subr.mxu0 0.0
        %578 = vmatpush1.msra.mxu0 0.0
        %579 = vmatprep.subr.mxu0 0.0
        %580 = vmatpush1.msra.mxu0 0.0
        %581 = vmatprep.subr.mxu0 0.0
        %582 = vmatpush1.msra.mxu0 0.0
        %583 = vmatprep.subr.mxu0 0.0
        %584 = vmatpush1.msra.mxu0 0.0
        %585 = vmatprep.subr.mxu0 0.0
        %586 = vmatpush1.msra.mxu0 0.0
        %587 = vmatprep.subr.mxu0 0.0
        %588 = vmatpush1.msra.mxu0 0.0
        %589 = vmatprep.subr.mxu0 0.0
        %590 = vmatpush1.msra.mxu0 0.0
        %591 = vmatprep.subr.mxu0 0.0
        %592 = vmatpush1.msra.mxu0 0.0
        %593 = vmatprep.subr.mxu0 0.0
        %594 = vmatpush1.msra.mxu0 0.0
        %595 = vmatprep.subr.mxu0 0.0
        %596 = vmatpush1.msra.mxu0 0.0
        %597 = vmatprep.subr.mxu0 0.0
        %598 = vmatpush1.msra.mxu0 0.0
        %599 = vmatprep.subr.mxu0 0.0
        %600 = vmatpush1.msra.mxu0 0.0
        %601 = vmatprep.subr.mxu0 0.0
        %602 = vmatpush1.msra.mxu0 0.0
        %603 = vmatprep.mubr.f32.mxu0 0.0
        %604 = vmatmul.mubr.f32.gmra.mrb[0].mxu0 %v537
        %v605 = vpop.f32.mrb[0].mxu0
        %v606 = vadd.f32 0.0, %v605
        %v607 = vpop.f32.mrb[0].mxu0
        %608 = vdwg.mxu0
        %v609 = vadd.f32 %v538, %v606
        %v610 = vtanh.pop %v609
        %611 = vmatprep.subr.mxu0 0.0
        %612 = vmatpush1.msra.mxu0 %v521
        %613 = vmatprep.subr.mxu0 0.0
        %614 = vmatpush1.msra.mxu0 %v522
        %615 = vmatprep.subr.mxu0 0.0
        %616 = vmatpush1.msra.mxu0 %v523
        %617 = vmatprep.subr.mxu0 0.0
        %618 = vmatpush1.msra.mxu0 %v524
        %619 = vmatprep.subr.mxu0 0.0
        %620 = vmatpush1.msra.mxu0 %v525
        %621 = vmatprep.subr.mxu0 0.0
        %622 = vmatpush1.msra.mxu0 %v526
        %623 = vmatprep.subr.mxu0 0.0
        %624 = vmatpush1.msra.mxu0 %v527
        %625 = vmatprep.subr.mxu0 0.0
        %626 = vmatpush1.msra.mxu0 %v528
        %627 = vmatprep.subr.mxu0 0.0
        %628 = vmatpush1.msra.mxu0 %v529
        %629 = vmatprep.subr.mxu0 0.0
        %630 = vmatpush1.msra.mxu0 %v530
        %631 = vmatprep.subr.mxu0 0.0
        %632 = vmatpush1.msra.mxu0 %v531
        %633 = vmatprep.subr.mxu0 0.0
        %634 = vmatpush1.msra.mxu0 %v532
        %635 = vmatprep.subr.mxu0 0.0
        %636 = vmatpush1.msra.mxu0 %v533
        %637 = vmatprep.subr.mxu0 0.0
        %638 = vmatpush1.msra.mxu0 %v534
        %639 = vmatprep.subr.mxu0 0.0
        %640 = vmatpush1.msra.mxu0 %v535
        %641 = vmatprep.subr.mxu0 0.0
        %642 = vmatpush1.msra.mxu0 %v536
        %643 = vmatprep.subr.mxu0 0.0
        %644 = vmatpush1.msra.mxu0 0.0
        %645 = vmatprep.subr.mxu0 0.0
        %646 = vmatpush1.msra.mxu0 0.0
        %647 = vmatprep.subr.mxu0 0.0
        %648 = vmatpush1.msra.mxu0 0.0
        %649 = vmatprep.subr.mxu0 0.0
        %650 = vmatpush1.msra.mxu0 0.0
        %651 = vmatprep.subr.mxu0 0.0
        %652 = vmatpush1.msra.mxu0 0.0
        %653 = vmatprep.subr.mxu0 0.0
        %654 = vmatpush1.msra.mxu0 0.0
        %655 = vmatprep.subr.mxu0 0.0
        %656 = vmatpush1.msra.mxu0 0.0
        %657 = vmatprep.subr.mxu0 0.0
        %658 = vmatpush1.msra.mxu0 0.0
        %659 = vmatprep.subr.mxu0 0.0
        %660 = vmatpush1.msra.mxu0 0.0
        %661 = vmatprep.subr.mxu0 0.0
        %662 = vmatpush1.msra.mxu0 0.0
        %663 = vmatprep.subr.mxu0 0.0
        %664 = vmatpush1.msra.mxu0 0.0
        %665 = vmatprep.subr.mxu0 0.0
        %666 = vmatpush1.msra.mxu0 0.0
        %667 = vmatprep.subr.mxu0 0.0
        %668 = vmatpush1.msra.mxu0 0.0
        %669 = vmatprep.subr.mxu0 0.0
        %670 = vmatpush1.msra.mxu0 0.0
        %671 = vmatprep.subr.mxu0 0.0
        %672 = vmatpush1.msra.mxu0 0.0
        %673 = vmatprep.subr.mxu0 0.0
        %674 = vmatpush1.msra.mxu0 0.0
        %675 = vmatprep.mubr.f32.mxu0 0.0
        %676 = vmatmul.mubr.f32.gmra.mrb[0].mxu0 %v610
        %v677 = vpop.f32.mrb[0].mxu0
        %v678 = vadd.f32 0.0, %v677
        %v679 = vpop.f32.mrb[0].mxu0
        %680 = vdwg.mxu0
        %681 = vst [vmem:[%s378] sm:$0xff] %v678
        %s682 = scalar_lea.vmem [#allocation2], 8
        %v683 = vld [vmem:[%s682] sm:$0xff]
        %684 = vmatprep.subr.mxu0 0.0
        %685 = vmatpush1.msra.mxu0 %v505
        %686 = vmatprep.subr.mxu0 0.0
        %687 = vmatpush1.msra.mxu0 %v506
        %688 = vmatprep.subr.mxu0 0.0
        %689 = vmatpush1.msra.mxu0 %v507
        %690 = vmatprep.subr.mxu0 0.0
        %691 = vmatpush1.msra.mxu0 %v508
        %692 = vmatprep.subr.mxu0 0.0
        %693 = vmatpush1.msra.mxu0 %v509
        %694 = vmatprep.subr.mxu0 0.0
        %695 = vmatpush1.msra.mxu0 %v510
        %696 = vmatprep.subr.mxu0 0.0
        %697 = vmatpush1.msra.mxu0 %v511
        %698 = vmatprep.subr.mxu0 0.0
        %699 = vmatpush1.msra.mxu0 %v512
        %700 = vmatprep.subr.mxu0 0.0
        %701 = vmatpush1.msra.mxu0 %v513
        %702 = vmatprep.subr.mxu0 0.0
        %703 = vmatpush1.msra.mxu0 %v514
        %704 = vmatprep.subr.mxu0 0.0
        %705 = vmatpush1.msra.mxu0 %v515
        %706 = vmatprep.subr.mxu0 0.0
        %707 = vmatpush1.msra.mxu0 %v516
        %708 = vmatprep.subr.mxu0 0.0
        %709 = vmatpush1.msra.mxu0 %v517
        %710 = vmatprep.subr.mxu0 0.0
        %711 = vmatpush1.msra.mxu0 %v518
        %712 = vmatprep.subr.mxu0 0.0
        %713 = vmatpush1.msra.mxu0 %v519
        %714 = vmatprep.subr.mxu0 0.0
        %715 = vmatpush1.msra.mxu0 %v520
        %716 = vmatprep.subr.mxu0 0.0
        %717 = vmatpush1.msra.mxu0 0.0
        %718 = vmatprep.subr.mxu0 0.0
        %719 = vmatpush1.msra.mxu0 0.0
        %720 = vmatprep.subr.mxu0 0.0
        %721 = vmatpush1.msra.mxu0 0.0
        %722 = vmatprep.subr.mxu0 0.0
        %723 = vmatpush1.msra.mxu0 0.0
        %724 = vmatprep.subr.mxu0 0.0
        %725 = vmatpush1.msra.mxu0 0.0
        %726 = vmatprep.subr.mxu0 0.0
        %727 = vmatpush1.msra.mxu0 0.0
        %728 = vmatprep.subr.mxu0 0.0
        %729 = vmatpush1.msra.mxu0 0.0
        %730 = vmatprep.subr.mxu0 0.0
        %731 = vmatpush1.msra.mxu0 0.0
        %732 = vmatprep.subr.mxu0 0.0
        %733 = vmatpush1.msra.mxu0 0.0
        %734 = vmatprep.subr.mxu0 0.0
        %735 = vmatpush1.msra.mxu0 0.0
        %736 = vmatprep.subr.mxu0 0.0
        %737 = vmatpush1.msra.mxu0 0.0
        %738 = vmatprep.subr.mxu0 0.0
        %739 = vmatpush1.msra.mxu0 0.0
        %740 = vmatprep.subr.mxu0 0.0
        %741 = vmatpush1.msra.mxu0 0.0
        %742 = vmatprep.subr.mxu0 0.0
        %743 = vmatpush1.msra.mxu0 0.0
        %744 = vmatprep.subr.mxu0 0.0
        %745 = vmatpush1.msra.mxu0 0.0
        %746 = vmatprep.subr.mxu0 0.0
        %747 = vmatpush1.msra.mxu0 0.0
        %748 = vmatprep.mubr.f32.mxu0 0.0
        %749 = vmatmul.mubr.f32.gmra.mrb[0].mxu0 %v610
        %v750 = vpop.f32.mrb[0].mxu0
        %v751 = vadd.f32 0.0, %v750
        %v752 = vpop.f32.mrb[0].mxu0
        %753 = vdwg.mxu0
        %v754 = vadd.f32 %v683, %v751
        %v755 = vtanh.pop %v754
        %756 = vmatprep.subr.mxu0 0.0
        %757 = vmatpush1.msra.mxu0 %v521
        %758 = vmatprep.subr.mxu0 0.0
        %759 = vmatpush1.msra.mxu0 %v522
        %760 = vmatprep.subr.mxu0 0.0
        %761 = vmatpush1.msra.mxu0 %v523
        %762 = vmatprep.subr.mxu0 0.0
        %763 = vmatpush1.msra.mxu0 %v524
        %764 = vmatprep.subr.mxu0 0.0
        %765 = vmatpush1.msra.mxu0 %v525
        %766 = vmatprep.subr.mxu0 0.0
        %767 = vmatpush1.msra.mxu0 %v526
        %768 = vmatprep.subr.mxu0 0.0
        %769 = vmatpush1.msra.mxu0 %v527
        %770 = vmatprep.subr.mxu0 0.0
        %771 = vmatpush1.msra.mxu0 %v528
        %772 = vmatprep.subr.mxu0 0.0
        %773 = vmatpush1.msra.mxu0 %v529
        %774 = vmatprep.subr.mxu0 0.0
        %775 = vmatpush1.msra.mxu0 %v530
        %776 = vmatprep.subr.mxu0 0.0
        %777 = vmatpush1.msra.mxu0 %v531
        %778 = vmatprep.subr.mxu0 0.0
        %779 = vmatpush1.msra.mxu0 %v532
        %780 = vmatprep.subr.mxu0 0.0
        %781 = vmatpush1.msra.mxu0 %v533
        %782 = vmatprep.subr.mxu0 0.0
        %783 = vmatpush1.msra.mxu0 %v534
        %784 = vmatprep.subr.mxu0 0.0
        %785 = vmatpush1.msra.mxu0 %v535
        %786 = vmatprep.subr.mxu0 0.0
        %787 = vmatpush1.msra.mxu0 %v536
        %788 = vmatprep.subr.mxu0 0.0
        %789 = vmatpush1.msra.mxu0 0.0
        %790 = vmatprep.subr.mxu0 0.0
        %791 = vmatpush1.msra.mxu0 0.0
        %792 = vmatprep.subr.mxu0 0.0
        %793 = vmatpush1.msra.mxu0 0.0
        %794 = vmatprep.subr.mxu0 0.0
        %795 = vmatpush1.msra.mxu0 0.0
        %796 = vmatprep.subr.mxu0 0.0
        %797 = vmatpush1.msra.mxu0 0.0
        %798 = vmatprep.subr.mxu0 0.0
        %799 = vmatpush1.msra.mxu0 0.0
        %800 = vmatprep.subr.mxu0 0.0
        %801 = vmatpush1.msra.mxu0 0.0
        %802 = vmatprep.subr.mxu0 0.0
        %803 = vmatpush1.msra.mxu0 0.0
        %804 = vmatprep.subr.mxu0 0.0
        %805 = vmatpush1.msra.mxu0 0.0
        %806 = vmatprep.subr.mxu0 0.0
        %807 = vmatpush1.msra.mxu0 0.0
        %808 = vmatprep.subr.mxu0 0.0
        %809 = vmatpush1.msra.mxu0 0.0
        %810 = vmatprep.subr.mxu0 0.0
        %811 = vmatpush1.msra.mxu0 0.0
        %812 = vmatprep.subr.mxu0 0.0
        %813 = vmatpush1.msra.mxu0 0.0
        %814 = vmatprep.subr.mxu0 0.0
        %815 = vmatpush1.msra.mxu0 0.0
        %816 = vmatprep.subr.mxu0 0.0
        %817 = vmatpush1.msra.mxu0 0.0
        %818 = vmatprep.subr.mxu0 0.0
        %819 = vmatpush1.msra.mxu0 0.0
        %820 = vmatprep.mubr.f32.mxu0 0.0
        %821 = vmatmul.mubr.f32.gmra.mrb[0].mxu0 %v755
        %v822 = vpop.f32.mrb[0].mxu0
        %v823 = vadd.f32 0.0, %v822
        %v824 = vpop.f32.mrb[0].mxu0
        %825 = vdwg.mxu0
        %s826 = scalar_lea.vmem %s378, 8 [#allocation13]
        %827 = vst [vmem:[%s826] sm:$0xff] %v823
        %s828 = scalar_lea.vmem [#allocation2], 16
        %v829 = vld [vmem:[%s828] sm:$0xff]
        %830 = vmatprep.subr.mxu0 0.0
        %831 = vmatpush1.msra.mxu0 %v505
        %832 = vmatprep.subr.mxu0 0.0
        %833 = vmatpush1.msra.mxu0 %v506
        %834 = vmatprep.subr.mxu0 0.0
        %835 = vmatpush1.msra.mxu0 %v507
        %836 = vmatprep.subr.mxu0 0.0
        %837 = vmatpush1.msra.mxu0 %v508
        %838 = vmatprep.subr.mxu0 0.0
        %839 = vmatpush1.msra.mxu0 %v509
        %840 = vmatprep.subr.mxu0 0.0
        %841 = vmatpush1.msra.mxu0 %v510
        %842 = vmatprep.subr.mxu0 0.0
        %843 = vmatpush1.msra.mxu0 %v511
        %844 = vmatprep.subr.mxu0 0.0
        %845 = vmatpush1.msra.mxu0 %v512
        %846 = vmatprep.subr.mxu0 0.0
        %847 = vmatpush1.msra.mxu0 %v513
        %848 = vmatprep.subr.mxu0 0.0
        %849 = vmatpush1.msra.mxu0 %v514
        %850 = vmatprep.subr.mxu0 0.0
        %851 = vmatpush1.msra.mxu0 %v515
        %852 = vmatprep.subr.mxu0 0.0
        %853 = vmatpush1.msra.mxu0 %v516
        %854 = vmatprep.subr.mxu0 0.0
        %855 = vmatpush1.msra.mxu0 %v517
        %856 = vmatprep.subr.mxu0 0.0
        %857 = vmatpush1.msra.mxu0 %v518
        %858 = vmatprep.subr.mxu0 0.0
        %859 = vmatpush1.msra.mxu0 %v519
        %860 = vmatprep.subr.mxu0 0.0
        %861 = vmatpush1.msra.mxu0 %v520
        %862 = vmatprep.subr.mxu0 0.0
        %863 = vmatpush1.msra.mxu0 0.0
        %864 = vmatprep.subr.mxu0 0.0
        %865 = vmatpush1.msra.mxu0 0.0
        %866 = vmatprep.subr.mxu0 0.0
        %867 = vmatpush1.msra.mxu0 0.0
        %868 = vmatprep.subr.mxu0 0.0
        %869 = vmatpush1.msra.mxu0 0.0
        %870 = vmatprep.subr.mxu0 0.0
        %871 = vmatpush1.msra.mxu0 0.0
        %872 = vmatprep.subr.mxu0 0.0
        %873 = vmatpush1.msra.mxu0 0.0
        %874 = vmatprep.subr.mxu0 0.0
        %875 = vmatpush1.msra.mxu0 0.0
        %876 = vmatprep.subr.mxu0 0.0
        %877 = vmatpush1.msra.mxu0 0.0
        %878 = vmatprep.subr.mxu0 0.0
        %879 = vmatpush1.msra.mxu0 0.0
        %880 = vmatprep.subr.mxu0 0.0
        %881 = vmatpush1.msra.mxu0 0.0
        %882 = vmatprep.subr.mxu0 0.0
        %883 = vmatpush1.msra.mxu0 0.0
        %884 = vmatprep.subr.mxu0 0.0
        %885 = vmatpush1.msra.mxu0 0.0
        %886 = vmatprep.subr.mxu0 0.0
        %887 = vmatpush1.msra.mxu0 0.0
        %888 = vmatprep.subr.mxu0 0.0
        %889 = vmatpush1.msra.mxu0 0.0
        %890 = vmatprep.subr.mxu0 0.0
        %891 = vmatpush1.msra.mxu0 0.0
        %892 = vmatprep.subr.mxu0 0.0
        %893 = vmatpush1.msra.mxu0 0.0
        %894 = vmatprep.mubr.f32.mxu0 0.0
        %895 = vmatmul.mubr.f32.gmra.mrb[0].mxu0 %v755
        %v896 = vpop.f32.mrb[0].mxu0
        %v897 = vadd.f32 0.0, %v896
        %v898 = vpop.f32.mrb[0].mxu0
        %899 = vdwg.mxu0
        %v900 = vadd.f32 %v829, %v897
        %v901 = vtanh.pop %v900
        %902 = vmatprep.subr.mxu0 0.0
        %903 = vmatpush1.msra.mxu0 %v521
        %904 = vmatprep.subr.mxu0 0.0
        %905 = vmatpush1.msra.mxu0 %v522
        %906 = vmatprep.subr.mxu0 0.0
        %907 = vmatpush1.msra.mxu0 %v523
        %908 = vmatprep.subr.mxu0 0.0
        %909 = vmatpush1.msra.mxu0 %v524
        %910 = vmatprep.subr.mxu0 0.0
        %911 = vmatpush1.msra.mxu0 %v525
        %912 = vmatprep.subr.mxu0 0.0
        %913 = vmatpush1.msra.mxu0 %v526
        %914 = vmatprep.subr.mxu0 0.0
        %915 = vmatpush1.msra.mxu0 %v527
        %916 = vmatprep.subr.mxu0 0.0
        %917 = vmatpush1.msra.mxu0 %v528
        %918 = vmatprep.subr.mxu0 0.0
        %919 = vmatpush1.msra.mxu0 %v529
        %920 = vmatprep.subr.mxu0 0.0
        %921 = vmatpush1.msra.mxu0 %v530
        %922 = vmatprep.subr.mxu0 0.0
        %923 = vmatpush1.msra.mxu0 %v531
        %924 = vmatprep.subr.mxu0 0.0
        %925 = vmatpush1.msra.mxu0 %v532
        %926 = vmatprep.subr.mxu0 0.0
        %927 = vmatpush1.msra.mxu0 %v533
        %928 = vmatprep.subr.mxu0 0.0
        %929 = vmatpush1.msra.mxu0 %v534
        %930 = vmatprep.subr.mxu0 0.0
        %931 = vmatpush1.msra.mxu0 %v535
        %932 = vmatprep.subr.mxu0 0.0
        %933 = vmatpush1.msra.mxu0 %v536
        %934 = vmatprep.subr.mxu0 0.0
        %935 = vmatpush1.msra.mxu0 0.0
        %936 = vmatprep.subr.mxu0 0.0
        %937 = vmatpush1.msra.mxu0 0.0
        %938 = vmatprep.subr.mxu0 0.0
        %939 = vmatpush1.msra.mxu0 0.0
        %940 = vmatprep.subr.mxu0 0.0
        %941 = vmatpush1.msra.mxu0 0.0
        %942 = vmatprep.subr.mxu0 0.0
        %943 = vmatpush1.msra.mxu0 0.0
        %944 = vmatprep.subr.mxu0 0.0
        %945 = vmatpush1.msra.mxu0 0.0
        %946 = vmatprep.subr.mxu0 0.0
        %947 = vmatpush1.msra.mxu0 0.0
        %948 = vmatprep.subr.mxu0 0.0
        %949 = vmatpush1.msra.mxu0 0.0
        %950 = vmatprep.subr.mxu0 0.0
        %951 = vmatpush1.msra.mxu0 0.0
        %952 = vmatprep.subr.mxu0 0.0
        %953 = vmatpush1.msra.mxu0 0.0
        %954 = vmatprep.subr.mxu0 0.0
        %955 = vmatpush1.msra.mxu0 0.0
        %956 = vmatprep.subr.mxu0 0.0
        %957 = vmatpush1.msra.mxu0 0.0
        %958 = vmatprep.subr.mxu0 0.0
        %959 = vmatpush1.msra.mxu0 0.0
        %960 = vmatprep.subr.mxu0 0.0
        %961 = vmatpush1.msra.mxu0 0.0
        %962 = vmatprep.subr.mxu0 0.0
        %963 = vmatpush1.msra.mxu0 0.0
        %964 = vmatprep.subr.mxu0 0.0
        %965 = vmatpush1.msra.mxu0 0.0
        %966 = vmatprep.mubr.f32.mxu0 0.0
        %967 = vmatmul.mubr.f32.gmra.mrb[0].mxu0 %v901
        %v968 = vpop.f32.mrb[0].mxu0
        %v969 = vadd.f32 0.0, %v968
        %v970 = vpop.f32.mrb[0].mxu0
        %971 = vdwg.mxu0
        %s972 = scalar_lea.vmem %s378, 16 [#allocation13]
        %973 = vst [vmem:[%s972] sm:$0xff] %v969
        %s974 = scalar_lea.vmem [#allocation2], 24
        %v975 = vld [vmem:[%s974] sm:$0xff]
        %976 = vmatprep.subr.mxu0 0.0
        %977 = vmatpush1.msra.mxu0 %v505
        %978 = vmatprep.subr.mxu0 0.0
        %979 = vmatpush1.msra.mxu0 %v506
        %980 = vmatprep.subr.mxu0 0.0
        %981 = vmatpush1.msra.mxu0 %v507
        %982 = vmatprep.subr.mxu0 0.0
        %983 = vmatpush1.msra.mxu0 %v508
        %984 = vmatprep.subr.mxu0 0.0
        %985 = vmatpush1.msra.mxu0 %v509
        %986 = vmatprep.subr.mxu0 0.0
        %987 = vmatpush1.msra.mxu0 %v510
        %988 = vmatprep.subr.mxu0 0.0
        %989 = vmatpush1.msra.mxu0 %v511
        %990 = vmatprep.subr.mxu0 0.0
        %991 = vmatpush1.msra.mxu0 %v512
        %992 = vmatprep.subr.mxu0 0.0
        %993 = vmatpush1.msra.mxu0 %v513
        %994 = vmatprep.subr.mxu0 0.0
        %995 = vmatpush1.msra.mxu0 %v514
        %996 = vmatprep.subr.mxu0 0.0
        %997 = vmatpush1.msra.mxu0 %v515
        %998 = vmatprep.subr.mxu0 0.0
        %999 = vmatpush1.msra.mxu0 %v516
        %1000 = vmatprep.subr.mxu0 0.0
        %1001 = vmatpush1.msra.mxu0 %v517
        %1002 = vmatprep.subr.mxu0 0.0
        %1003 = vmatpush1.msra.mxu0 %v518
        %1004 = vmatprep.subr.mxu0 0.0
        %1005 = vmatpush1.msra.mxu0 %v519
        %1006 = vmatprep.subr.mxu0 0.0
        %1007 = vmatpush1.msra.mxu0 %v520
        %1008 = vmatprep.subr.mxu0 0.0
        %1009 = vmatpush1.msra.mxu0 0.0
        %1010 = vmatprep.subr.mxu0 0.0
        %1011 = vmatpush1.msra.mxu0 0.0
        %1012 = vmatprep.subr.mxu0 0.0
        %1013 = vmatpush1.msra.mxu0 0.0
        %1014 = vmatprep.subr.mxu0 0.0
        %1015 = vmatpush1.msra.mxu0 0.0
        %1016 = vmatprep.subr.mxu0 0.0
        %1017 = vmatpush1.msra.mxu0 0.0
        %1018 = vmatprep.subr.mxu0 0.0
        %1019 = vmatpush1.msra.mxu0 0.0
        %1020 = vmatprep.subr.mxu0 0.0
        %1021 = vmatpush1.msra.mxu0 0.0
        %1022 = vmatprep.subr.mxu0 0.0
        %1023 = vmatpush1.msra.mxu0 0.0
        %1024 = vmatprep.subr.mxu0 0.0
        %1025 = vmatpush1.msra.mxu0 0.0
        %1026 = vmatprep.subr.mxu0 0.0
        %1027 = vmatpush1.msra.mxu0 0.0
        %1028 = vmatprep.subr.mxu0 0.0
        %1029 = vmatpush1.msra.mxu0 0.0
        %1030 = vmatprep.subr.mxu0 0.0
        %1031 = vmatpush1.msra.mxu0 0.0
        %1032 = vmatprep.subr.mxu0 0.0
        %1033 = vmatpush1.msra.mxu0 0.0
        %1034 = vmatprep.subr.mxu0 0.0
        %1035 = vmatpush1.msra.mxu0 0.0
        %1036 = vmatprep.subr.mxu0 0.0
        %1037 = vmatpush1.msra.mxu0 0.0
        %1038 = vmatprep.subr.mxu0 0.0
        %1039 = vmatpush1.msra.mxu0 0.0
        %1040 = vmatprep.mubr.f32.mxu0 0.0
        %1041 = vmatmul.mubr.f32.gmra.mrb[0].mxu0 %v901
        %v1042 = vpop.f32.mrb[0].mxu0
        %v1043 = vadd.f32 0.0, %v1042
        %v1044 = vpop.f32.mrb[0].mxu0
        %1045 = vdwg.mxu0
        %v1046 = vadd.f32 %v975, %v1043
        %v1047 = vtanh.pop %v1046
        %1048 = vmatprep.subr.mxu0 0.0
        %1049 = vmatpush1.msra.mxu0 %v521
        %1050 = vmatprep.subr.mxu0 0.0
        %1051 = vmatpush1.msra.mxu0 %v522
        %1052 = vmatprep.subr.mxu0 0.0
        %1053 = vmatpush1.msra.mxu0 %v523
        %1054 = vmatprep.subr.mxu0 0.0
        %1055 = vmatpush1.msra.mxu0 %v524
        %1056 = vmatprep.subr.mxu0 0.0
        %1057 = vmatpush1.msra.mxu0 %v525
        %1058 = vmatprep.subr.mxu0 0.0
        %1059 = vmatpush1.msra.mxu0 %v526
        %1060 = vmatprep.subr.mxu0 0.0
        %1061 = vmatpush1.msra.mxu0 %v527
        %1062 = vmatprep.subr.mxu0 0.0
        %1063 = vmatpush1.msra.mxu0 %v528
        %1064 = vmatprep.subr.mxu0 0.0
        %1065 = vmatpush1.msra.mxu0 %v529
        %1066 = vmatprep.subr.mxu0 0.0
        %1067 = vmatpush1.msra.mxu0 %v530
        %1068 = vmatprep.subr.mxu0 0.0
        %1069 = vmatpush1.msra.mxu0 %v531
        %1070 = vmatprep.subr.mxu0 0.0
        %1071 = vmatpush1.msra.mxu0 %v532
        %1072 = vmatprep.subr.mxu0 0.0
        %1073 = vmatpush1.msra.mxu0 %v533
        %1074 = vmatprep.subr.mxu0 0.0
        %1075 = vmatpush1.msra.mxu0 %v534
        %1076 = vmatprep.subr.mxu0 0.0
        %1077 = vmatpush1.msra.mxu0 %v535
        %1078 = vmatprep.subr.mxu0 0.0
        %1079 = vmatpush1.msra.mxu0 %v536
        %1080 = vmatprep.subr.mxu0 0.0
        %1081 = vmatpush1.msra.mxu0 0.0
        %1082 = vmatprep.subr.mxu0 0.0
        %1083 = vmatpush1.msra.mxu0 0.0
        %1084 = vmatprep.subr.mxu0 0.0
        %1085 = vmatpush1.msra.mxu0 0.0
        %1086 = vmatprep.subr.mxu0 0.0
        %1087 = vmatpush1.msra.mxu0 0.0
        %1088 = vmatprep.subr.mxu0 0.0
        %1089 = vmatpush1.msra.mxu0 0.0
        %1090 = vmatprep.subr.mxu0 0.0
        %1091 = vmatpush1.msra.mxu0 0.0
        %1092 = vmatprep.subr.mxu0 0.0
        %1093 = vmatpush1.msra.mxu0 0.0
        %1094 = vmatprep.subr.mxu0 0.0
        %1095 = vmatpush1.msra.mxu0 0.0
        %1096 = vmatprep.subr.mxu0 0.0
        %1097 = vmatpush1.msra.mxu0 0.0
        %1098 = vmatprep.subr.mxu0 0.0
        %1099 = vmatpush1.msra.mxu0 0.0
        %1100 = vmatprep.subr.mxu0 0.0
        %1101 = vmatpush1.msra.mxu0 0.0
        %1102 = vmatprep.subr.mxu0 0.0
        %1103 = vmatpush1.msra.mxu0 0.0
        %1104 = vmatprep.subr.mxu0 0.0
        %1105 = vmatpush1.msra.mxu0 0.0
        %1106 = vmatprep.subr.mxu0 0.0
        %1107 = vmatpush1.msra.mxu0 0.0
        %1108 = vmatprep.subr.mxu0 0.0
        %1109 = vmatpush1.msra.mxu0 0.0
        %1110 = vmatprep.subr.mxu0 0.0
        %1111 = vmatpush1.msra.mxu0 0.0
        %1112 = vmatprep.mubr.f32.mxu0 0.0
        %1113 = vmatmul.mubr.f32.gmra.mrb[0].mxu0 %v1047
        %v1114 = vpop.f32.mrb[0].mxu0
        %v1115 = vadd.f32 0.0, %v1114
        %v1116 = vpop.f32.mrb[0].mxu0
        %1117 = vdwg.mxu0
        %s1118 = scalar_lea.vmem %s378, 24 [#allocation13]
        %1119 = vst [vmem:[%s1118] sm:$0xff] %v1115
        %1120 = vst [vmem:[#allocation3] sm:$0xff] %v1047
        %p1121 = scmp.eq.s32.totalorder %s33, 1
        // Predicated region
        $region69: #{tpu_custom_call.1} parent=43 // pred_check
          %p1122 = pneg %p1121
        $region70: #{tpu_custom_call.1} parent=43 // pred_check_branch
          %1124 = sbr.rel (%p1122) target = $region72
        $region71: #{tpu_custom_call.1} parent=43 // pred_region
          %1125 = vst [vmem:[#allocation14] sm:$0xff] %v1047
        $region72: #{tpu_custom_call.1} parent=43 // pred_fallthru
          _
        %s1126 = sand.u32 %s188, 1
        %s1127 = scalar_lea.sflag [#allocation6], %s1126
        %s1128 = sand.u32 %s188, 1
        %s1129 = smul.addr %s1128, 32
        %s1130 = scalar_lea.vmem [#allocation13], %s1129
        // Predicated region
        $region73: #{tpu_custom_call.1} parent=43 // pred_check
          %p1131 = pneg %p198
        $region74: #{tpu_custom_call.1} parent=43 // pred_check_branch
          %1133 = sbr.rel (%p1131) target = $region76
        $region75: #{tpu_custom_call.1} parent=43 // pred_region
          %s1134 = smul.u32 4, %s33
          %s1136 = ssub.s32 512, 512
          %1137 = vsyncadd %s1127, %s1136
          %s1138 = sadd.s32 %s32, %s1134
          %s1139 = smul.addr %s1138, 128
          %s1140 = scalar_lea.hbm %s6, %s1139
          %s1141 = sshll.u32 %s1130, 4
          %s1142 = int_to_ptr.vmem [resolvable:$true] %s1141
          %1147 = dma.vmem_to_hbm [thread:$0]  %s1142, 512, %s1140, %s1127, 128, 128, 8
        $region76: #{tpu_custom_call.1} parent=43 // pred_fallthru
          _
        // Predicated region
        $region77: #{tpu_custom_call.1} parent=43 // pred_check
          %p1148 = pneg %p224
        $region78: #{tpu_custom_call.1} parent=43 // pred_check_branch
          %1150 = sbr.rel (%p1148) target = $region80
        $region79: #{tpu_custom_call.1} parent=43 // pred_region
          %s1152 = ssub.s32 128, 128
          %1153 = vsyncadd [#allocation15], %s1152
          %s1154 = smul.addr %s32, 128
          %s1155 = scalar_lea.hbm %s7, %s1154
          %s1157 = sshll.u32 [#allocation14], 4
          %s1158 = int_to_ptr.vmem [resolvable:$true] %s1157
          %1160 = dma.vmem_to_hbm [thread:$0]  %s1158, 128, %s1155, [#allocation15]
        $region80: #{tpu_custom_call.1} parent=43 // pred_fallthru
          _
        // Predicated region
        $region81: #{tpu_custom_call.1} parent=43 // pred_check
          %p1161 = pneg %p224
        $region82: #{tpu_custom_call.1} parent=43 // pred_check_branch
          %1163 = sbr.rel (%p1161) target = $region84
        $region83: #{tpu_custom_call.1} parent=43 // pred_region
          %1164 = dma.done [#allocation15], 128
        $region84: #{tpu_custom_call.1} parent=43 // pred_fallthru
          _
      $region44: #{tpu_custom_call.1} parent=5 // pred_fallthru
        _
      %p1165 = scmp.le.s32.totalorder 2, %s23
      // Predicated region
      $region85: #{tpu_custom_call.1} parent=5 // pred_check
        %p1166 = pneg %p1165
      $region86: #{tpu_custom_call.1} parent=5 // pred_check_branch
        %1168 = sbr.rel (%p1166) target = $region88
      $region87: #{tpu_custom_call.1} parent=5 // pred_region
        %s1169 = ssub.s32 %s23, 2
        // Predicated region
        $region89: #{tpu_custom_call.1} parent=87 // pred_check
          %p1170 = pneg %p204
        $region90: #{tpu_custom_call.1} parent=87 // pred_check_branch
          %1172 = sbr.rel (%p1170) target = $region92
        $region91: #{tpu_custom_call.1} parent=87 // pred_region
          %s1173 = sand.u32 %s189, 1
          %s1174 = scalar_lea.sflag [#allocation6], %s1173
          %s1175 = sand.u32 %s189, 1
          %s1176 = smul.addr %s1175, 32
          %s1177 = scalar_lea.vmem [#allocation13], %s1176
          %1178 = dma.done %s1174, 512
        $region92: #{tpu_custom_call.1} parent=87 // pred_fallthru
          _
      $region88: #{tpu_custom_call.1} parent=5 // pred_fallthru
        _
    $region6: #{tpu_custom_call.1} parent=1 // loop_footer
      %s27 = sadd.s32 1, %s23
    $region7: #{tpu_custom_call.1} parent=1 // loop_footer_branch
      %22 = sbr.rel target = $region3
    $region8: #{tpu_custom_call.1} parent=1 // loop_exit
      _
    %1179 = vsyncpa [#allocation5], 1
    %s1180 = scalar_lea.sflag [#allocation5], 1
    %1181 = vsyncpa %s1180, 1
    %1182 = vsyncpa [#allocation8], 1
    %1183 = vsyncpa [#allocation11], 1
    %1184 = vsyncpa [#allocation6], 1
    %s1185 = scalar_lea.sflag [#allocation6], 1
    %1186 = vsyncpa %s1185, 1
    %1187 = vsyncpa [#allocation15], 1

</llo_original>
